<compile_context>
chip_gen: v7x
topology: tpu7x:2x2x1
jax: 0.10.0
libtpu: 0.0.40
codegen_flags: <defaults>
</compile_context>

<pallas_src>
import functools

import jax
import jax.numpy as jnp
from jax.experimental import pallas as pl
from jax.experimental.pallas import tpu as pltpu

LANE = 128
MAX_TB = 1024  # cap the batch tile so VMEM stays tiny even for huge batches


def _round_up(x, m):
    return (x + m - 1) // m * m


def _num_tensorcores():
    """2 TensorCores per chip on v7x, 1 on v5e/v6e."""
    try:
        kind = jax.devices()[0].device_kind.lower()
    except Exception:  # pragma: no cover - defensive
        return 1
    return 2 if ("v7" in kind or "7x" in kind) else 1


def _pick_tiling(batch):
    """Pick (tb, Bp): one grid step per TensorCore, tile rows multiple of 8, tb <= MAX_TB."""
    n_tc = _num_tensorcores()
    tb = min(_round_up(max(batch // n_tc, 1), 8), MAX_TB)
    bp = _round_up(batch, tb)
    return tb, bp


def mlp_kernel(x_ref, w1_ref, w2_ref, w3_ref, b_ref, o_ref):
    # x_ref: (tb, D_in) f32; w*: bf16 padded; b_ref: (8, W) f32 (rows 0..2 = b1,b2,b3);
    # o_ref: (tb, Op) f32.
    hp = w1_ref.shape[1]
    op = w3_ref.shape[1]
    x = x_ref[...].astype(jnp.bfloat16)              # cast on the VPU (has slack), not in XLA
    b = b_ref[...]
    b1 = b[0:1, :hp]
    b2 = b[1:2, :hp]
    b3 = b[2:3, :op]

    h1 = jnp.dot(x, w1_ref[...], preferred_element_type=jnp.float32) + b1
    h1 = jnp.maximum(h1, 0.0)                        # bias + ReLU in f32 (works on v5e too)
    h2 = jnp.dot(h1.astype(jnp.bfloat16), w2_ref[...],
                 preferred_element_type=jnp.float32) + b2
    h2 = jnp.maximum(h2, 0.0)
    out = jnp.dot(h2.astype(jnp.bfloat16), w3_ref[...],
                  preferred_element_type=jnp.float32) + b3
    o_ref[...] = out.astype(o_ref.dtype)


def prepare_params(params):
    """One-time prep: zero-pad hidden/output dims to 128, cast weights to bf16,
    pack the three biases into a single (8, W) f32 block (rows 0..2)."""
    w1, b1 = params["w1"], params["b1"]
    w2, b2 = params["w2"], params["b2"]
    w3, b3 = params["w3"], params["b3"]
    d_in, n_units = w1.shape
    n_out = w3.shape[1]
    hp = _round_up(n_units, LANE)
    op = _round_up(n_out, LANE)
    w = max(hp, op)

    bf16 = jnp.bfloat16
    w1p = jnp.zeros((d_in, hp), bf16).at[:, :n_units].set(w1.astype(bf16))
    w2p = jnp.zeros((hp, hp), bf16).at[:n_units, :n_units].set(w2.astype(bf16))
    w3p = jnp.zeros((hp, op), bf16).at[:n_units, :n_out].set(w3.astype(bf16))
    bp = jnp.zeros((8, w), jnp.float32)
    bp = bp.at[0, :n_units].set(b1)
    bp = bp.at[1, :n_units].set(b2)
    bp = bp.at[2, :n_out].set(b3)
    return {"w1": w1p, "w2": w2p, "w3": w3p, "b": bp}


@functools.partial(jax.jit, static_argnames=("n_units", "n_out"))
def mlp_forward(x, prepped, *, n_units, n_out):
    """x: (B, 784) float32. prepped: output of prepare_params. Returns (B, n_out) float32."""
    B, d_in = x.shape
    w1p, w2p, w3p, bp = prepped["w1"], prepped["w2"], prepped["w3"], prepped["b"]
    hp = w1p.shape[1]
    op = w3p.shape[1]
    bw = bp.shape[1]

    tb, Bp = _pick_tiling(B)
    # Only pad the batch if needed (skipped entirely when B % tb == 0).
    xp = x if Bp == B else jnp.zeros((Bp, d_in), x.dtype).at[:B, :].set(x)

    grid = (Bp // tb,)
    full = lambda i: (0, 0)  # grid-invariant weights/biases stay resident in VMEM

    # Advisory cost estimate based on true math / actual DMA bytes (not padded FLOPs).
    flops = 2 * B * (d_in * n_units + n_units * n_units + n_units * n_out)
    bytes_accessed = (
        Bp * d_in * 4                                    # x (f32, read once)
        + (w1p.size + w2p.size + w3p.size) * 2           # bf16 weights
        + bp.size * 4                                    # packed biases (f32)
        + B * n_out * 4                                  # useful output (f32)
    )

    out_padded = pl.pallas_call(
        mlp_kernel,
        out_shape=jax.ShapeDtypeStruct((Bp, op), jnp.float32),
        grid_spec=pltpu.PrefetchScalarGridSpec(
            num_scalar_prefetch=0,
            grid=grid,
            in_specs=[
                pl.BlockSpec((tb, d_in), lambda i: (i, 0)),   # only x changes per step
                pl.BlockSpec((d_in, hp), full),
                pl.BlockSpec((hp, hp), full),
                pl.BlockSpec((hp, op), full),
                pl.BlockSpec((8, bw), full),                  # packed biases: one tiny DMA
            ],
            out_specs=pl.BlockSpec((tb, op), lambda i: (i, 0)),
        ),
        compiler_params=pltpu.CompilerParams(
            dimension_semantics=("parallel",),
            vmem_limit_bytes=32 * 1024 * 1024,
        ),
        cost_estimate=pl.CostEstimate(
            flops=flops, transcendentals=0, bytes_accessed=bytes_accessed
        ),
    )(xp, w1p, w2p, w3p, bp)

    # Slice padded batch rows / lane-padded output columns back to the true shape.
    return out_padded[:B, :n_out]


def init_params(key, n_units, n_out=10, d_in=28 * 28):
    # Deterministic init mimicking PyTorch nn.Linear: U(-1/sqrt(fan_in), 1/sqrt(fan_in))
    ks = jax.random.split(key, 6)

    def linear(kw, kb, fan_in, fan_out):
        bound = 1.0 / jnp.sqrt(fan_in)
        w = jax.random.uniform(kw, (fan_in, fan_out), jnp.float32, -bound, bound)
        b = jax.random.uniform(kb, (fan_out,), jnp.float32, -bound, bound)
        return w, b

    w1, b1 = linear(ks[0], ks[1], d_in, n_units)
    w2, b2 = linear(ks[2], ks[3], n_units, n_units)
    w3, b3 = linear(ks[4], ks[5], n_units, n_out)
    return {"w1": w1, "b1": b1, "w2": w2, "b2": b2, "w3": w3, "b3": b3}


if __name__ == "__main__":
    key = jax.random.PRNGKey(0)
    k_x, k_p = jax.random.split(key)

    B = 256
    n_units = 32
    n_out = 10
    x = jax.random.normal(k_x, (B, 28 * 28), jnp.float32)
    params = init_params(k_p, n_units=n_units, n_out=n_out)

    # One-time prep (hoisted out of the per-call path per perf feedback).
    prepped = prepare_params(params)
    prepped = jax.tree_util.tree_map(jax.block_until_ready, prepped)

    out = mlp_forward(x, prepped, n_units=n_units, n_out=n_out)
    out = jax.block_until_ready(out)

    # Reference check in plain JAX (same math as the PyTorch module, full f32).
    h = jnp.maximum(x @ params["w1"] + params["b1"], 0.0)
    h = jnp.maximum(h @ params["w2"] + params["b2"], 0.0)
    ref = h @ params["w3"] + params["b3"]
    assert out.shape == (B, n_out)
    # bf16 matmul inputs with f32 accumulation -> relaxed tolerance vs full-f32 ref.
    assert jnp.allclose(out, ref, atol=5e-2, rtol=5e-2)

    print("KERNEL_OK")
</pallas_src>

<mosaic_0001>
module attributes {stable_mosaic.version = 11 : i64} {
  func.func @mlp_kernel(%arg0: i32, %arg1: memref<256x784xf32, #tpu.memory_space<vmem>>, %arg2: memref<784x128xbf16, #tpu.memory_space<vmem>>, %arg3: memref<128x128xbf16, #tpu.memory_space<vmem>>, %arg4: memref<128x128xbf16, #tpu.memory_space<vmem>>, %arg5: memref<8x128xf32, #tpu.memory_space<vmem>>, %arg6: memref<256x128xf32, #tpu.memory_space<vmem>>) attributes {dimension_semantics = [#tpu.dimension_semantics<parallel>], iteration_bounds = array<i64: 1>, scalar_prefetch = 0 : i64, scratch_operands = 0 : i64, tpu.core_type = #tpu.core_type<tc>, window_params = [{transform_indices = @transform_0, window_bounds = array<i64: 256, 784>}, {pipeline_mode = #tpu.pipeline_mode<synchronous>, transform_indices = @transform_1, window_bounds = array<i64: 784, 128>}, {pipeline_mode = #tpu.pipeline_mode<synchronous>, transform_indices = @transform_2, window_bounds = array<i64: 128, 128>}, {pipeline_mode = #tpu.pipeline_mode<synchronous>, transform_indices = @transform_3, window_bounds = array<i64: 128, 128>}, {pipeline_mode = #tpu.pipeline_mode<synchronous>, transform_indices = @transform_4, window_bounds = array<i64: 8, 128>}, {transform_indices = @transform_5, window_bounds = array<i64: 256, 128>}]} {
    %c0 = arith.constant 0 : index
    %c0_0 = arith.constant 0 : index
    %0 = vector.load %arg1[%c0, %c0_0] : memref<256x784xf32, #tpu.memory_space<vmem>>, vector<256x784xf32>
    %1 = arith.truncf %0 : vector<256x784xf32> to vector<256x784xbf16>
    %c0_1 = arith.constant 0 : index
    %c0_2 = arith.constant 0 : index
    %2 = vector.load %arg5[%c0_1, %c0_2] : memref<8x128xf32, #tpu.memory_space<vmem>>, vector<8x128xf32>
    %3 = vector.extract_strided_slice %2 {offsets = [0, 0], sizes = [1, 128], strides = [1, 1]} : vector<8x128xf32> to vector<1x128xf32>
    %4 = vector.extract_strided_slice %2 {offsets = [1, 0], sizes = [1, 128], strides = [1, 1]} : vector<8x128xf32> to vector<1x128xf32>
    %5 = vector.extract_strided_slice %2 {offsets = [2, 0], sizes = [1, 128], strides = [1, 1]} : vector<8x128xf32> to vector<1x128xf32>
    %c0_3 = arith.constant 0 : index
    %c0_4 = arith.constant 0 : index
    %6 = vector.load %arg2[%c0_3, %c0_4] : memref<784x128xbf16, #tpu.memory_space<vmem>>, vector<784x128xbf16>
    %cst = arith.constant dense<0.000000e+00> : vector<256x128xf32>
    %7 = tpu.matmul %1, %6, %cst {dimension_numbers = #tpu.dot_dimension_numbers<[1], [0], [0], [1], [0, 0, 1, 1], [], []>} : vector<256x784xbf16>, vector<784x128xbf16>, vector<256x128xf32> -> vector<256x128xf32>
    %8 = vector.broadcast %3 : vector<1x128xf32> to vector<256x128xf32>
    %9 = arith.addf %7, %8 : vector<256x128xf32>
    %cst_5 = arith.constant 0.000000e+00 : f32
    %10 = vector.broadcast %cst_5 : f32 to vector<256x128xf32>
    %11 = arith.maximumf %9, %10 : vector<256x128xf32>
    %12 = arith.truncf %11 : vector<256x128xf32> to vector<256x128xbf16>
    %c0_6 = arith.constant 0 : index
    %c0_7 = arith.constant 0 : index
    %13 = vector.load %arg3[%c0_6, %c0_7] : memref<128x128xbf16, #tpu.memory_space<vmem>>, vector<128x128xbf16>
    %cst_8 = arith.constant dense<0.000000e+00> : vector<256x128xf32>
    %14 = tpu.matmul %12, %13, %cst_8 {dimension_numbers = #tpu.dot_dimension_numbers<[1], [0], [0], [1], [0, 0, 1, 1], [], []>} : vector<256x128xbf16>, vector<128x128xbf16>, vector<256x128xf32> -> vector<256x128xf32>
    %15 = vector.broadcast %4 : vector<1x128xf32> to vector<256x128xf32>
    %16 = arith.addf %14, %15 : vector<256x128xf32>
    %cst_9 = arith.constant 0.000000e+00 : f32
    %17 = vector.broadcast %cst_9 : f32 to vector<256x128xf32>
    %18 = arith.maximumf %16, %17 : vector<256x128xf32>
    %19 = arith.truncf %18 : vector<256x128xf32> to vector<256x128xbf16>
    %c0_10 = arith.constant 0 : index
    %c0_11 = arith.constant 0 : index
    %20 = vector.load %arg4[%c0_10, %c0_11] : memref<128x128xbf16, #tpu.memory_space<vmem>>, vector<128x128xbf16>
    %cst_12 = arith.constant dense<0.000000e+00> : vector<256x128xf32>
    %21 = tpu.matmul %19, %20, %cst_12 {dimension_numbers = #tpu.dot_dimension_numbers<[1], [0], [0], [1], [0, 0, 1, 1], [], []>} : vector<256x128xbf16>, vector<128x128xbf16>, vector<256x128xf32> -> vector<256x128xf32>
    %22 = vector.broadcast %5 : vector<1x128xf32> to vector<256x128xf32>
    %23 = arith.addf %21, %22 : vector<256x128xf32>
    %c0_13 = arith.constant 0 : index
    %c0_14 = arith.constant 0 : index
    %24 = vector.load %arg6[%c0_13, %c0_14] : memref<256x128xf32, #tpu.memory_space<vmem>>, vector<256x128xf32>
    tpu.vector_store %arg6[%c0_13, %c0_14], %23 {strides = array<i32>} : memref<256x128xf32, #tpu.memory_space<vmem>>, vector<256x128xf32>,
    return
  }
  func.func @transform_0(%arg0: i32) -> (i32, i32) {
    %c0_i32 = arith.constant 0 : i32
    %c0_i32_0 = arith.constant 0 : i32
    return %arg0, %c0_i32 : i32, i32
  }
  func.func @transform_1(%arg0: i32) -> (i32, i32) {
    %c0_i32 = arith.constant 0 : i32
    %c0_i32_0 = arith.constant 0 : i32
    %c0_i32_1 = arith.constant 0 : i32
    return %c0_i32, %c0_i32_0 : i32, i32
  }
  func.func @transform_2(%arg0: i32) -> (i32, i32) {
    %c0_i32 = arith.constant 0 : i32
    %c0_i32_0 = arith.constant 0 : i32
    %c0_i32_1 = arith.constant 0 : i32
    return %c0_i32, %c0_i32_0 : i32, i32
  }
  func.func @transform_3(%arg0: i32) -> (i32, i32) {
    %c0_i32 = arith.constant 0 : i32
    %c0_i32_0 = arith.constant 0 : i32
    %c0_i32_1 = arith.constant 0 : i32
    return %c0_i32, %c0_i32_0 : i32, i32
  }
  func.func @transform_4(%arg0: i32) -> (i32, i32) {
    %c0_i32 = arith.constant 0 : i32
    %c0_i32_0 = arith.constant 0 : i32
    %c0_i32_1 = arith.constant 0 : i32
    return %c0_i32, %c0_i32_0 : i32, i32
  }
  func.func @transform_5(%arg0: i32) -> (i32, i32) {
    %c0_i32 = arith.constant 0 : i32
    %c0_i32_0 = arith.constant 0 : i32
    return %arg0, %c0_i32 : i32, i32
  }
}

</mosaic_0001>

<llo_original>
// kernel: mlp_forward.1
$region0: #{mlp_forward.1}
  #allocation0 [shape = 'u32[]', space=smem, size = 0x4, offset = 0x4, fixed_abs, tag = 'smem constant byte address 0x4 - core index']
  #allocation1 [shape = 'u32[144,128]{1,0:T(1,128)}', space=vmem, size = 0x12000, scoped, tag = 'internal scratch']
  %s0 = inlined_call_operand.vmem [shape: f32[256,784], index: 0, kind: input, shape index: {}]
  %s1 = inlined_call_operand.vmem [shape: bf16[784,128], index: 1, kind: input, shape index: {}]
  %s2 = inlined_call_operand.vmem [shape: bf16[128,128], index: 2, kind: input, shape index: {}]
  %s3 = inlined_call_operand.vmem [shape: bf16[128,128], index: 3, kind: input, shape index: {}]
  %s4 = inlined_call_operand.vmem [shape: f32[8,128], index: 4, kind: input, shape index: {}]
  %s5 = inlined_call_operand.vmem [shape: f32[256,128], index: 5, kind: output, shape index: {}]
  %s6 = sld [smem:[#allocation0]]
  $region30: #{mlp_forward.1} parent=0
    _
  %s8 = ssub.s32 1, %s6
  %s9 = scalar_select 0, %s8, %s6
  // Predicated region
  $region2: #{mlp_forward.1} parent=0 // pred_check
    _
  $region3: #{mlp_forward.1} parent=0 // pred_check_branch
    %11 = sbr.rel (0) target = $region5
  $region4: #{mlp_forward.1} parent=0 // pred_region
    _
  $region5: #{mlp_forward.1} parent=0 // pred_fallthru
    _
  // Predicated region
  $region6: #{mlp_forward.1} parent=0 // pred_check
    _
  $region7: #{mlp_forward.1} parent=0 // pred_check_branch
    %13 = sbr.rel (0) target = $region9
  $region8: #{mlp_forward.1} parent=0 // pred_region
    _
  $region9: #{mlp_forward.1} parent=0 // pred_fallthru
    _
  // Predicated region
  $region10: #{mlp_forward.1} parent=0 // pred_check
    _
  $region11: #{mlp_forward.1} parent=0 // pred_check_branch
    %15 = sbr.rel (0) target = $region13
  $region12: #{mlp_forward.1} parent=0 // pred_region
    _
  $region13: #{mlp_forward.1} parent=0 // pred_fallthru
    _
  // Predicated region
  $region14: #{mlp_forward.1} parent=0 // pred_check
    _
  $region15: #{mlp_forward.1} parent=0 // pred_check_branch
    %17 = sbr.rel (0) target = $region17
  $region16: #{mlp_forward.1} parent=0 // pred_region
    _
  $region17: #{mlp_forward.1} parent=0 // pred_fallthru
    _
  // Predicated region
  $region18: #{mlp_forward.1} parent=0 // pred_check
    _
  $region19: #{mlp_forward.1} parent=0 // pred_check_branch
    %19 = sbr.rel (0) target = $region21
  $region20: #{mlp_forward.1} parent=0 // pred_region
    _
  $region21: #{mlp_forward.1} parent=0 // pred_fallthru
    _
  %v21 = vld [vmem:[%s0] sm:$0xff]
  %v22 = vld [vmem:[%s0 + $0x8] sm:$0xff]
  %v23 = vld [vmem:[%s0 + $0x10] sm:$0xff]
  %v24 = vld [vmem:[%s0 + $0x18] sm:$0xff]
  %v25 = vld [vmem:[%s0 + $0x20] sm:$0xff]
  %v26 = vld [vmem:[%s0 + $0x28] sm:$0xff]
  %v27 = vld [vmem:[%s0 + $0x30] sm:$0xff]
  %v28 = vld [vmem:[%s0 + $0x38] sm:$0xff]
  %v29 = vld [vmem:[%s0 + $0x40] sm:$0xff]
  %v30 = vld [vmem:[%s0 + $0x48] sm:$0xff]
  %v31 = vld [vmem:[%s0 + $0x50] sm:$0xff]
  %v32 = vld [vmem:[%s0 + $0x58] sm:$0xff]
  %v33 = vld [vmem:[%s0 + $0x60] sm:$0xff]
  %v34 = vld [vmem:[%s0 + $0x68] sm:$0xff]
  %v35 = vld [vmem:[%s0 + $0x70] sm:$0xff]
  %v36 = vld [vmem:[%s0 + $0x78] sm:$0xff]
  %v37 = vld [vmem:[%s0 + $0x80] sm:$0xff]
  %v38 = vld [vmem:[%s0 + $0x88] sm:$0xff]
  %v39 = vld [vmem:[%s0 + $0x90] sm:$0xff]
  %v40 = vld [vmem:[%s0 + $0x98] sm:$0xff]
  %v41 = vld [vmem:[%s0 + $0xa0] sm:$0xff]
  %v42 = vld [vmem:[%s0 + $0xa8] sm:$0xff]
  %v43 = vld [vmem:[%s0 + $0xb0] sm:$0xff]
  %v44 = vld [vmem:[%s0 + $0xb8] sm:$0xff]
  %v45 = vld [vmem:[%s0 + $0xc0] sm:$0xff]
  %v46 = vld [vmem:[%s0 + $0xc8] sm:$0xff]
  %v47 = vld [vmem:[%s0 + $0xd0] sm:$0xff]
  %v48 = vld [vmem:[%s0 + $0xd8] sm:$0xff]
  %v49 = vld [vmem:[%s0 + $0xe0] sm:$0xff]
  %v50 = vld [vmem:[%s0 + $0xe8] sm:$0xff]
  %v51 = vld [vmem:[%s0 + $0xf0] sm:$0xff]
  %v52 = vld [vmem:[%s0 + $0xf8] sm:$0xff]
  %v53 = vld [vmem:[%s0 + $0x100] sm:$0xff]
  %v54 = vld [vmem:[%s0 + $0x108] sm:$0xff]
  %v55 = vld [vmem:[%s0 + $0x110] sm:$0xff]
  %v56 = vld [vmem:[%s0 + $0x118] sm:$0xff]
  %v57 = vld [vmem:[%s0 + $0x120] sm:$0xff]
  %v58 = vld [vmem:[%s0 + $0x128] sm:$0xff]
  %v59 = vld [vmem:[%s0 + $0x130] sm:$0xff]
  %v60 = vld [vmem:[%s0 + $0x138] sm:$0xff]
  %v61 = vld [vmem:[%s0 + $0x140] sm:$0xff]
  %v62 = vld [vmem:[%s0 + $0x148] sm:$0xff]
  %v63 = vld [vmem:[%s0 + $0x150] sm:$0xff]
  %v64 = vld [vmem:[%s0 + $0x158] sm:$0xff]
  %v65 = vld [vmem:[%s0 + $0x160] sm:$0xff]
  %v66 = vld [vmem:[%s0 + $0x168] sm:$0xff]
  %v67 = vld [vmem:[%s0 + $0x170] sm:$0xff]
  %v68 = vld [vmem:[%s0 + $0x178] sm:$0xff]
  %v69 = vld [vmem:[%s0 + $0x180] sm:$0xff]
  %v70 = vld [vmem:[%s0 + $0x188] sm:$0xff]
  %v71 = vld [vmem:[%s0 + $0x190] sm:$0xff]
  %v72 = vld [vmem:[%s0 + $0x198] sm:$0xff]
  %v73 = vld [vmem:[%s0 + $0x1a0] sm:$0xff]
  %v74 = vld [vmem:[%s0 + $0x1a8] sm:$0xff]
  %v75 = vld [vmem:[%s0 + $0x1b0] sm:$0xff]
  %v76 = vld [vmem:[%s0 + $0x1b8] sm:$0xff]
  %v77 = vld [vmem:[%s0 + $0x1c0] sm:$0xff]
  %v78 = vld [vmem:[%s0 + $0x1c8] sm:$0xff]
  %v79 = vld [vmem:[%s0 + $0x1d0] sm:$0xff]
  %v80 = vld [vmem:[%s0 + $0x1d8] sm:$0xff]
  %v81 = vld [vmem:[%s0 + $0x1e0] sm:$0xff]
  %v82 = vld [vmem:[%s0 + $0x1e8] sm:$0xff]
  %v83 = vld [vmem:[%s0 + $0x1f0] sm:$0xff]
  %v84 = vld [vmem:[%s0 + $0x1f8] sm:$0xff]
  %v85 = vld [vmem:[%s0 + $0x200] sm:$0xff]
  %v86 = vld [vmem:[%s0 + $0x208] sm:$0xff]
  %v87 = vld [vmem:[%s0 + $0x210] sm:$0xff]
  %v88 = vld [vmem:[%s0 + $0x218] sm:$0xff]
  %v89 = vld [vmem:[%s0 + $0x220] sm:$0xff]
  %v90 = vld [vmem:[%s0 + $0x228] sm:$0xff]
  %v91 = vld [vmem:[%s0 + $0x230] sm:$0xff]
  %v92 = vld [vmem:[%s0 + $0x238] sm:$0xff]
  %v93 = vld [vmem:[%s0 + $0x240] sm:$0xff]
  %v94 = vld [vmem:[%s0 + $0x248] sm:$0xff]
  %v95 = vld [vmem:[%s0 + $0x250] sm:$0xff]
  %v96 = vld [vmem:[%s0 + $0x258] sm:$0xff]
  %v97 = vld [vmem:[%s0 + $0x260] sm:$0xff]
  %v98 = vld [vmem:[%s0 + $0x268] sm:$0xff]
  %v99 = vld [vmem:[%s0 + $0x270] sm:$0xff]
  %v100 = vld [vmem:[%s0 + $0x278] sm:$0xff]
  %v101 = vld [vmem:[%s0 + $0x280] sm:$0xff]
  %v102 = vld [vmem:[%s0 + $0x288] sm:$0xff]
  %v103 = vld [vmem:[%s0 + $0x290] sm:$0xff]
  %v104 = vld [vmem:[%s0 + $0x298] sm:$0xff]
  %v105 = vld [vmem:[%s0 + $0x2a0] sm:$0xff]
  %v106 = vld [vmem:[%s0 + $0x2a8] sm:$0xff]
  %v107 = vld [vmem:[%s0 + $0x2b0] sm:$0xff]
  %v108 = vld [vmem:[%s0 + $0x2b8] sm:$0xff]
  %v109 = vld [vmem:[%s0 + $0x2c0] sm:$0xff]
  %v110 = vld [vmem:[%s0 + $0x2c8] sm:$0xff]
  %v111 = vld [vmem:[%s0 + $0x2d0] sm:$0xff]
  %v112 = vld [vmem:[%s0 + $0x2d8] sm:$0xff]
  %v113 = vld [vmem:[%s0 + $0x2e0] sm:$0xff]
  %v114 = vld [vmem:[%s0 + $0x2e8] sm:$0xff]
  %v115 = vld [vmem:[%s0 + $0x2f0] sm:$0xff]
  %v116 = vld [vmem:[%s0 + $0x2f8] sm:$0xff]
  %v117 = vld [vmem:[%s0 + $0x300] sm:$0xff]
  %v118 = vld [vmem:[%s0 + $0x308] sm:$0xff]
  %v119 = vld [vmem:[%s0 + $0x310] sm:$0xff]
  %v120 = vld [vmem:[%s0 + $0x318] sm:$0xff]
  %v121 = vld [vmem:[%s0 + $0x320] sm:$0xff]
  %v122 = vld [vmem:[%s0 + $0x328] sm:$0xff]
  %v123 = vld [vmem:[%s0 + $0x330] sm:$0xff]
  %v124 = vld [vmem:[%s0 + $0x338] sm:$0xff]
  %v125 = vld [vmem:[%s0 + $0x340] sm:$0xff]
  %v126 = vld [vmem:[%s0 + $0x348] sm:$0xff]
  %v127 = vld [vmem:[%s0 + $0x350] sm:$0xff]
  %v128 = vld [vmem:[%s0 + $0x358] sm:$0xff]
  %v129 = vld [vmem:[%s0 + $0x360] sm:$0xff]
  %v130 = vld [vmem:[%s0 + $0x368] sm:$0xff]
  %v131 = vld [vmem:[%s0 + $0x370] sm:$0xff]
  %v132 = vld [vmem:[%s0 + $0x378] sm:$0xff]
  %v133 = vld [vmem:[%s0 + $0x380] sm:$0xff]
  %v134 = vld [vmem:[%s0 + $0x388] sm:$0xff]
  %v135 = vld [vmem:[%s0 + $0x390] sm:$0xff]
  %v136 = vld [vmem:[%s0 + $0x398] sm:$0xff]
  %v137 = vld [vmem:[%s0 + $0x3a0] sm:$0xff]
  %v138 = vld [vmem:[%s0 + $0x3a8] sm:$0xff]
  %v139 = vld [vmem:[%s0 + $0x3b0] sm:$0xff]
  %v140 = vld [vmem:[%s0 + $0x3b8] sm:$0xff]
  %v141 = vld [vmem:[%s0 + $0x3c0] sm:$0xff]
  %v142 = vld [vmem:[%s0 + $0x3c8] sm:$0xff]
  %v143 = vld [vmem:[%s0 + $0x3d0] sm:$0xff]
  %v144 = vld [vmem:[%s0 + $0x3d8] sm:$0xff]
  %v145 = vld [vmem:[%s0 + $0x3e0] sm:$0xff]
  %v146 = vld [vmem:[%s0 + $0x3e8] sm:$0xff]
  %v147 = vld [vmem:[%s0 + $0x3f0] sm:$0xff]
  %v148 = vld [vmem:[%s0 + $0x3f8] sm:$0xff]
  %v149 = vld [vmem:[%s0 + $0x400] sm:$0xff]
  %v150 = vld [vmem:[%s0 + $0x408] sm:$0xff]
  %v151 = vld [vmem:[%s0 + $0x410] sm:$0xff]
  %v152 = vld [vmem:[%s0 + $0x418] sm:$0xff]
  %v153 = vld [vmem:[%s0 + $0x420] sm:$0xff]
  %v154 = vld [vmem:[%s0 + $0x428] sm:$0xff]
  %v155 = vld [vmem:[%s0 + $0x430] sm:$0xff]
  %v156 = vld [vmem:[%s0 + $0x438] sm:$0xff]
  %v157 = vld [vmem:[%s0 + $0x440] sm:$0xff]
  %v158 = vld [vmem:[%s0 + $0x448] sm:$0xff]
  %v159 = vld [vmem:[%s0 + $0x450] sm:$0xff]
  %v160 = vld [vmem:[%s0 + $0x458] sm:$0xff]
  %v161 = vld [vmem:[%s0 + $0x460] sm:$0xff]
  %v162 = vld [vmem:[%s0 + $0x468] sm:$0xff]
  %v163 = vld [vmem:[%s0 + $0x470] sm:$0xff]
  %v164 = vld [vmem:[%s0 + $0x478] sm:$0xff]
  %v165 = vld [vmem:[%s0 + $0x480] sm:$0xff]
  %v166 = vld [vmem:[%s0 + $0x488] sm:$0xff]
  %v167 = vld [vmem:[%s0 + $0x490] sm:$0xff]
  %v168 = vld [vmem:[%s0 + $0x498] sm:$0xff]
  %v169 = vld [vmem:[%s0 + $0x4a0] sm:$0xff]
  %v170 = vld [vmem:[%s0 + $0x4a8] sm:$0xff]
  %v171 = vld [vmem:[%s0 + $0x4b0] sm:$0xff]
  %v172 = vld [vmem:[%s0 + $0x4b8] sm:$0xff]
  %v173 = vld [vmem:[%s0 + $0x4c0] sm:$0xff]
  %v174 = vld [vmem:[%s0 + $0x4c8] sm:$0xff]
  %v175 = vld [vmem:[%s0 + $0x4d0] sm:$0xff]
  %v176 = vld [vmem:[%s0 + $0x4d8] sm:$0xff]
  %v177 = vld [vmem:[%s0 + $0x4e0] sm:$0xff]
  %v178 = vld [vmem:[%s0 + $0x4e8] sm:$0xff]
  %v179 = vld [vmem:[%s0 + $0x4f0] sm:$0xff]
  %v180 = vld [vmem:[%s0 + $0x4f8] sm:$0xff]
  %v181 = vld [vmem:[%s0 + $0x500] sm:$0xff]
  %v182 = vld [vmem:[%s0 + $0x508] sm:$0xff]
  %v183 = vld [vmem:[%s0 + $0x510] sm:$0xff]
  %v184 = vld [vmem:[%s0 + $0x518] sm:$0xff]
  %v185 = vld [vmem:[%s0 + $0x520] sm:$0xff]
  %v186 = vld [vmem:[%s0 + $0x528] sm:$0xff]
  %v187 = vld [vmem:[%s0 + $0x530] sm:$0xff]
  %v188 = vld [vmem:[%s0 + $0x538] sm:$0xff]
  %v189 = vld [vmem:[%s0 + $0x540] sm:$0xff]
  %v190 = vld [vmem:[%s0 + $0x548] sm:$0xff]
  %v191 = vld [vmem:[%s0 + $0x550] sm:$0xff]
  %v192 = vld [vmem:[%s0 + $0x558] sm:$0xff]
  %v193 = vld [vmem:[%s0 + $0x560] sm:$0xff]
  %v194 = vld [vmem:[%s0 + $0x568] sm:$0xff]
  %v195 = vld [vmem:[%s0 + $0x570] sm:$0xff]
  %v196 = vld [vmem:[%s0 + $0x578] sm:$0xff]
  %v197 = vld [vmem:[%s0 + $0x580] sm:$0xff]
  %v198 = vld [vmem:[%s0 + $0x588] sm:$0xff]
  %v199 = vld [vmem:[%s0 + $0x590] sm:$0xff]
  %v200 = vld [vmem:[%s0 + $0x598] sm:$0xff]
  %v201 = vld [vmem:[%s0 + $0x5a0] sm:$0xff]
  %v202 = vld [vmem:[%s0 + $0x5a8] sm:$0xff]
  %v203 = vld [vmem:[%s0 + $0x5b0] sm:$0xff]
  %v204 = vld [vmem:[%s0 + $0x5b8] sm:$0xff]
  %v205 = vld [vmem:[%s0 + $0x5c0] sm:$0xff]
  %v206 = vld [vmem:[%s0 + $0x5c8] sm:$0xff]
  %v207 = vld [vmem:[%s0 + $0x5d0] sm:$0xff]
  %v208 = vld [vmem:[%s0 + $0x5d8] sm:$0xff]
  %v209 = vld [vmem:[%s0 + $0x5e0] sm:$0xff]
  %v210 = vld [vmem:[%s0 + $0x5e8] sm:$0xff]
  %v211 = vld [vmem:[%s0 + $0x5f0] sm:$0xff]
  %v212 = vld [vmem:[%s0 + $0x5f8] sm:$0xff]
  %v213 = vld [vmem:[%s0 + $0x600] sm:$0xff]
  %v214 = vld [vmem:[%s0 + $0x608] sm:$0xff]
  %v215 = vld [vmem:[%s0 + $0x610] sm:$0xff]
  %v216 = vld [vmem:[%s0 + $0x618] sm:$0xff]
  %v217 = vld [vmem:[%s0 + $0x620] sm:$0xff]
  %v218 = vld [vmem:[%s0 + $0x628] sm:$0xff]
  %v219 = vld [vmem:[%s0 + $0x630] sm:$0xff]
  %v220 = vld [vmem:[%s0 + $0x638] sm:$0xff]
  %v221 = vld [vmem:[%s0 + $0x640] sm:$0xff]
  %v222 = vld [vmem:[%s0 + $0x648] sm:$0xff]
  %v223 = vld [vmem:[%s0 + $0x650] sm:$0xff]
  %v224 = vld [vmem:[%s0 + $0x658] sm:$0xff]
  %v225 = vld [vmem:[%s0 + $0x660] sm:$0xff]
  %v226 = vld [vmem:[%s0 + $0x668] sm:$0xff]
  %v227 = vld [vmem:[%s0 + $0x670] sm:$0xff]
  %v228 = vld [vmem:[%s0 + $0x678] sm:$0xff]
  %v229 = vld [vmem:[%s0 + $0x680] sm:$0xff]
  %v230 = vld [vmem:[%s0 + $0x688] sm:$0xff]
  %v231 = vld [vmem:[%s0 + $0x690] sm:$0xff]
  %v232 = vld [vmem:[%s0 + $0x698] sm:$0xff]
  %v233 = vld [vmem:[%s0 + $0x6a0] sm:$0xff]
  %v234 = vld [vmem:[%s0 + $0x6a8] sm:$0xff]
  %v235 = vld [vmem:[%s0 + $0x6b0] sm:$0xff]
  %v236 = vld [vmem:[%s0 + $0x6b8] sm:$0xff]
  %v237 = vld [vmem:[%s0 + $0x6c0] sm:$0xff]
  %v238 = vld [vmem:[%s0 + $0x6c8] sm:$0xff]
  %v239 = vld [vmem:[%s0 + $0x6d0] sm:$0xff]
  %v240 = vld [vmem:[%s0 + $0x6d8] sm:$0xff]
  %v241 = vld [vmem:[%s0 + $0x6e0] sm:$0xff]
  %v242 = vld [vmem:[%s0 + $0x6e8] sm:$0xff]
  %v243 = vld [vmem:[%s0 + $0x6f0] sm:$0xff]
  %v244 = vld [vmem:[%s0 + $0x6f8] sm:$0xff]
  %v245 = vpack.c.bf16 %v28, %v21
  %v246 = vpack.c.bf16 %v29, %v22
  %v247 = vpack.c.bf16 %v30, %v23
  %v248 = vpack.c.bf16 %v31, %v24
  %v249 = vpack.c.bf16 %v32, %v25
  %v250 = vpack.c.bf16 %v33, %v26
  %v251 = vpack.c.bf16 %v34, %v27
  %v252 = vpack.c.bf16 %v42, %v35
  %v253 = vpack.c.bf16 %v43, %v36
  %v254 = vpack.c.bf16 %v44, %v37
  %v255 = vpack.c.bf16 %v45, %v38
  %v256 = vpack.c.bf16 %v46, %v39
  %v257 = vpack.c.bf16 %v47, %v40
  %v258 = vpack.c.bf16 %v48, %v41
  %v259 = vpack.c.bf16 %v56, %v49
  %v260 = vpack.c.bf16 %v57, %v50
  %v261 = vpack.c.bf16 %v58, %v51
  %v262 = vpack.c.bf16 %v59, %v52
  %v263 = vpack.c.bf16 %v60, %v53
  %v264 = vpack.c.bf16 %v61, %v54
  %v265 = vpack.c.bf16 %v62, %v55
  %v266 = vpack.c.bf16 %v70, %v63
  %v267 = vpack.c.bf16 %v71, %v64
  %v268 = vpack.c.bf16 %v72, %v65
  %v269 = vpack.c.bf16 %v73, %v66
  %v270 = vpack.c.bf16 %v74, %v67
  %v271 = vpack.c.bf16 %v75, %v68
  %v272 = vpack.c.bf16 %v76, %v69
  %v273 = vpack.c.bf16 %v84, %v77
  %v274 = vpack.c.bf16 %v85, %v78
  %v275 = vpack.c.bf16 %v86, %v79
  %v276 = vpack.c.bf16 %v87, %v80
  %v277 = vpack.c.bf16 %v88, %v81
  %v278 = vpack.c.bf16 %v89, %v82
  %v279 = vpack.c.bf16 %v90, %v83
  %v280 = vpack.c.bf16 %v98, %v91
  %v281 = vpack.c.bf16 %v99, %v92
  %v282 = vpack.c.bf16 %v100, %v93
  %v283 = vpack.c.bf16 %v101, %v94
  %v284 = vpack.c.bf16 %v102, %v95
  %v285 = vpack.c.bf16 %v103, %v96
  %v286 = vpack.c.bf16 %v104, %v97
  %v287 = vpack.c.bf16 %v112, %v105
  %v288 = vpack.c.bf16 %v113, %v106
  %v289 = vpack.c.bf16 %v114, %v107
  %v290 = vpack.c.bf16 %v115, %v108
  %v291 = vpack.c.bf16 %v116, %v109
  %v292 = vpack.c.bf16 %v117, %v110
  %v293 = vpack.c.bf16 %v118, %v111
  %v294 = vpack.c.bf16 %v126, %v119
  %v295 = vpack.c.bf16 %v127, %v120
  %v296 = vpack.c.bf16 %v128, %v121
  %v297 = vpack.c.bf16 %v129, %v122
  %v298 = vpack.c.bf16 %v130, %v123
  %v299 = vpack.c.bf16 %v131, %v124
  %v300 = vpack.c.bf16 %v132, %v125
  %v301 = vpack.c.bf16 %v140, %v133
  %v302 = vpack.c.bf16 %v141, %v134
  %v303 = vpack.c.bf16 %v142, %v135
  %v304 = vpack.c.bf16 %v143, %v136
  %v305 = vpack.c.bf16 %v144, %v137
  %v306 = vpack.c.bf16 %v145, %v138
  %v307 = vpack.c.bf16 %v146, %v139
  %v308 = vpack.c.bf16 %v154, %v147
  %v309 = vpack.c.bf16 %v155, %v148
  %v310 = vpack.c.bf16 %v156, %v149
  %v311 = vpack.c.bf16 %v157, %v150
  %v312 = vpack.c.bf16 %v158, %v151
  %v313 = vpack.c.bf16 %v159, %v152
  %v314 = vpack.c.bf16 %v160, %v153
  %v315 = vpack.c.bf16 %v168, %v161
  %v316 = vpack.c.bf16 %v169, %v162
  %v317 = vpack.c.bf16 %v170, %v163
  %v318 = vpack.c.bf16 %v171, %v164
  %v319 = vpack.c.bf16 %v172, %v165
  %v320 = vpack.c.bf16 %v173, %v166
  %v321 = vpack.c.bf16 %v174, %v167
  %v322 = vpack.c.bf16 %v182, %v175
  %v323 = vpack.c.bf16 %v183, %v176
  %v324 = vpack.c.bf16 %v184, %v177
  %v325 = vpack.c.bf16 %v185, %v178
  %v326 = vpack.c.bf16 %v186, %v179
  %v327 = vpack.c.bf16 %v187, %v180
  %v328 = vpack.c.bf16 %v188, %v181
  %v329 = vpack.c.bf16 %v196, %v189
  %v330 = vpack.c.bf16 %v197, %v190
  %v331 = vpack.c.bf16 %v198, %v191
  %v332 = vpack.c.bf16 %v199, %v192
  %v333 = vpack.c.bf16 %v200, %v193
  %v334 = vpack.c.bf16 %v201, %v194
  %v335 = vpack.c.bf16 %v202, %v195
  %v336 = vpack.c.bf16 %v210, %v203
  %v337 = vpack.c.bf16 %v211, %v204
  %v338 = vpack.c.bf16 %v212, %v205
  %v339 = vpack.c.bf16 %v213, %v206
  %v340 = vpack.c.bf16 %v214, %v207
  %v341 = vpack.c.bf16 %v215, %v208
  %v342 = vpack.c.bf16 %v216, %v209
  %v343 = vpack.c.bf16 %v224, %v217
  %v344 = vpack.c.bf16 %v225, %v218
  %v345 = vpack.c.bf16 %v226, %v219
  %v346 = vpack.c.bf16 %v227, %v220
  %v347 = vpack.c.bf16 %v228, %v221
  %v348 = vpack.c.bf16 %v229, %v222
  %v349 = vpack.c.bf16 %v230, %v223
  %v350 = vpack.c.bf16 %v238, %v231
  %v351 = vpack.c.bf16 %v239, %v232
  %v352 = vpack.c.bf16 %v240, %v233
  %v353 = vpack.c.bf16 %v241, %v234
  %v354 = vpack.c.bf16 %v242, %v235
  %v355 = vpack.c.bf16 %v243, %v236
  %v356 = vpack.c.bf16 %v244, %v237
  %v357 = vld [vmem:[%s4] sm:$0xff]
  %v358 = vld [vmem:[%s1] sm:$0xf]
  %v359 = vld [vmem:[%s1 + $0x4] sm:$0xf]
  %v360 = vld [vmem:[%s1 + $0x8] sm:$0xf]
  %v361 = vld [vmem:[%s1 + $0xc] sm:$0xf]
  %v362 = vld [vmem:[%s1 + $0x10] sm:$0xf]
  %v363 = vld [vmem:[%s1 + $0x14] sm:$0xf]
  %v364 = vld [vmem:[%s1 + $0x18] sm:$0xf]
  %v365 = vld [vmem:[%s1 + $0x1c] sm:$0xf]
  %v366 = vld [vmem:[%s1 + $0x20] sm:$0xf]
  %v367 = vld [vmem:[%s1 + $0x24] sm:$0xf]
  %v368 = vld [vmem:[%s1 + $0x28] sm:$0xf]
  %v369 = vld [vmem:[%s1 + $0x2c] sm:$0xf]
  %v370 = vld [vmem:[%s1 + $0x30] sm:$0xf]
  %v371 = vld [vmem:[%s1 + $0x34] sm:$0xf]
  %v372 = vld [vmem:[%s1 + $0x38] sm:$0xf]
  %v373 = vld [vmem:[%s1 + $0x3c] sm:$0xf]
  %v374 = vld [vmem:[%s1 + $0x40] sm:$0xf]
  %v375 = vld [vmem:[%s1 + $0x44] sm:$0xf]
  %v376 = vld [vmem:[%s1 + $0x48] sm:$0xf]
  %v377 = vld [vmem:[%s1 + $0x4c] sm:$0xf]
  %v378 = vld [vmem:[%s1 + $0x50] sm:$0xf]
  %v379 = vld [vmem:[%s1 + $0x54] sm:$0xf]
  %v380 = vld [vmem:[%s1 + $0x58] sm:$0xf]
  %v381 = vld [vmem:[%s1 + $0x5c] sm:$0xf]
  %v382 = vld [vmem:[%s1 + $0x60] sm:$0xf]
  %v383 = vld [vmem:[%s1 + $0x64] sm:$0xf]
  %v384 = vld [vmem:[%s1 + $0x68] sm:$0xf]
  %v385 = vld [vmem:[%s1 + $0x6c] sm:$0xf]
  %v386 = vld [vmem:[%s1 + $0x70] sm:$0xf]
  %v387 = vld [vmem:[%s1 + $0x74] sm:$0xf]
  %v388 = vld [vmem:[%s1 + $0x78] sm:$0xf]
  %v389 = vld [vmem:[%s1 + $0x7c] sm:$0xf]
  %v390 = vld [vmem:[%s1 + $0x80] sm:$0xf]
  %v391 = vld [vmem:[%s1 + $0x84] sm:$0xf]
  %v392 = vld [vmem:[%s1 + $0x88] sm:$0xf]
  %v393 = vld [vmem:[%s1 + $0x8c] sm:$0xf]
  %v394 = vld [vmem:[%s1 + $0x90] sm:$0xf]
  %v395 = vld [vmem:[%s1 + $0x94] sm:$0xf]
  %v396 = vld [vmem:[%s1 + $0x98] sm:$0xf]
  %v397 = vld [vmem:[%s1 + $0x9c] sm:$0xf]
  %v398 = vld [vmem:[%s1 + $0xa0] sm:$0xf]
  %v399 = vld [vmem:[%s1 + $0xa4] sm:$0xf]
  %v400 = vld [vmem:[%s1 + $0xa8] sm:$0xf]
  %v401 = vld [vmem:[%s1 + $0xac] sm:$0xf]
  %v402 = vld [vmem:[%s1 + $0xb0] sm:$0xf]
  %v403 = vld [vmem:[%s1 + $0xb4] sm:$0xf]
  %v404 = vld [vmem:[%s1 + $0xb8] sm:$0xf]
  %v405 = vld [vmem:[%s1 + $0xbc] sm:$0xf]
  %v406 = vld [vmem:[%s1 + $0xc0] sm:$0xf]
  %v407 = vld [vmem:[%s1 + $0xc4] sm:$0xf]
  %v408 = vld [vmem:[%s1 + $0xc8] sm:$0xf]
  %v409 = vld [vmem:[%s1 + $0xcc] sm:$0xf]
  %v410 = vld [vmem:[%s1 + $0xd0] sm:$0xf]
  %v411 = vld [vmem:[%s1 + $0xd4] sm:$0xf]
  %v412 = vld [vmem:[%s1 + $0xd8] sm:$0xf]
  %v413 = vld [vmem:[%s1 + $0xdc] sm:$0xf]
  %v414 = vld [vmem:[%s1 + $0xe0] sm:$0xf]
  %v415 = vld [vmem:[%s1 + $0xe4] sm:$0xf]
  %v416 = vld [vmem:[%s1 + $0xe8] sm:$0xf]
  %v417 = vld [vmem:[%s1 + $0xec] sm:$0xf]
  %v418 = vld [vmem:[%s1 + $0xf0] sm:$0xf]
  %v419 = vld [vmem:[%s1 + $0xf4] sm:$0xf]
  %v420 = vld [vmem:[%s1 + $0xf8] sm:$0xf]
  %v421 = vld [vmem:[%s1 + $0xfc] sm:$0xf]
  %v422 = vld [vmem:[%s1 + $0x100] sm:$0xf]
  %v423 = vld [vmem:[%s1 + $0x104] sm:$0xf]
  %v424 = vld [vmem:[%s1 + $0x108] sm:$0xf]
  %v425 = vld [vmem:[%s1 + $0x10c] sm:$0xf]
  %v426 = vld [vmem:[%s1 + $0x110] sm:$0xf]
  %v427 = vld [vmem:[%s1 + $0x114] sm:$0xf]
  %v428 = vld [vmem:[%s1 + $0x118] sm:$0xf]
  %v429 = vld [vmem:[%s1 + $0x11c] sm:$0xf]
  %v430 = vld [vmem:[%s1 + $0x120] sm:$0xf]
  %v431 = vld [vmem:[%s1 + $0x124] sm:$0xf]
  %v432 = vld [vmem:[%s1 + $0x128] sm:$0xf]
  %v433 = vld [vmem:[%s1 + $0x12c] sm:$0xf]
  %v434 = vld [vmem:[%s1 + $0x130] sm:$0xf]
  %v435 = vld [vmem:[%s1 + $0x134] sm:$0xf]
  %v436 = vld [vmem:[%s1 + $0x138] sm:$0xf]
  %v437 = vld [vmem:[%s1 + $0x13c] sm:$0xf]
  %v438 = vld [vmem:[%s1 + $0x140] sm:$0xf]
  %v439 = vld [vmem:[%s1 + $0x144] sm:$0xf]
  %v440 = vld [vmem:[%s1 + $0x148] sm:$0xf]
  %v441 = vld [vmem:[%s1 + $0x14c] sm:$0xf]
  %v442 = vld [vmem:[%s1 + $0x150] sm:$0xf]
  %v443 = vld [vmem:[%s1 + $0x154] sm:$0xf]
  %v444 = vld [vmem:[%s1 + $0x158] sm:$0xf]
  %v445 = vld [vmem:[%s1 + $0x15c] sm:$0xf]
  %v446 = vld [vmem:[%s1 + $0x160] sm:$0xf]
  %v447 = vld [vmem:[%s1 + $0x164] sm:$0xf]
  %v448 = vld [vmem:[%s1 + $0x168] sm:$0xf]
  %v449 = vld [vmem:[%s1 + $0x16c] sm:$0xf]
  %v450 = vld [vmem:[%s1 + $0x170] sm:$0xf]
  %v451 = vld [vmem:[%s1 + $0x174] sm:$0xf]
  %v452 = vld [vmem:[%s1 + $0x178] sm:$0xf]
  %v453 = vld [vmem:[%s1 + $0x17c] sm:$0xf]
  %v454 = vld [vmem:[%s1 + $0x180] sm:$0xf]
  %v455 = vld [vmem:[%s1 + $0x184] sm:$0xf]
  %v456 = vlaneseq
  %v457 = vshrl.u32 %v456, 7
  %v458 = vsub.s32 0, %v457
  %v459 = vrot.slane %v357, %v458
  %v558 = vunpack.c.l.b16 %v358
  %v559 = vunpack.c.l.b16 %v359
  %v560 = vunpack.c.l.b16 %v360
  %v561 = vunpack.c.l.b16 %v361
  %v562 = vunpack.c.l.b16 %v362
  %v563 = vunpack.c.l.b16 %v363
  %v564 = vunpack.c.l.b16 %v364
  %v565 = vunpack.c.l.b16 %v365
  %v566 = vunpack.c.l.b16 %v366
  %v567 = vunpack.c.l.b16 %v367
  %v568 = vunpack.c.l.b16 %v368
  %v569 = vunpack.c.l.b16 %v369
  %v570 = vunpack.c.l.b16 %v370
  %v571 = vunpack.c.l.b16 %v371
  %v572 = vunpack.c.l.b16 %v372
  %v573 = vunpack.c.l.b16 %v373
  %v574 = vunpack.c.l.b16 %v374
  %v575 = vunpack.c.l.b16 %v375
  %v576 = vunpack.c.l.b16 %v376
  %v577 = vunpack.c.l.b16 %v377
  %v578 = vunpack.c.l.b16 %v378
  %v579 = vunpack.c.l.b16 %v379
  %v580 = vunpack.c.l.b16 %v380
  %v581 = vunpack.c.l.b16 %v381
  %v582 = vunpack.c.l.b16 %v382
  %v583 = vunpack.c.l.b16 %v383
  %v584 = vunpack.c.l.b16 %v384
  %v585 = vunpack.c.l.b16 %v385
  %v586 = vunpack.c.l.b16 %v386
  %v587 = vunpack.c.l.b16 %v387
  %v588 = vunpack.c.l.b16 %v388
  %v589 = vunpack.c.l.b16 %v389
  %v590 = vunpack.c.l.b16 %v390
  %v591 = vunpack.c.l.b16 %v391
  %v592 = vunpack.c.l.b16 %v392
  %v593 = vunpack.c.l.b16 %v393
  %v594 = vunpack.c.l.b16 %v394
  %v595 = vunpack.c.l.b16 %v395
  %v596 = vunpack.c.l.b16 %v396
  %v597 = vunpack.c.l.b16 %v397
  %v598 = vunpack.c.l.b16 %v398
  %v599 = vunpack.c.l.b16 %v399
  %v600 = vunpack.c.l.b16 %v400
  %v601 = vunpack.c.l.b16 %v401
  %v602 = vunpack.c.l.b16 %v402
  %v603 = vunpack.c.l.b16 %v403
  %v604 = vunpack.c.l.b16 %v404
  %v605 = vunpack.c.l.b16 %v405
  %v606 = vunpack.c.l.b16 %v406
  %v607 = vunpack.c.l.b16 %v407
  %v608 = vunpack.c.l.b16 %v408
  %v609 = vunpack.c.l.b16 %v409
  %v610 = vunpack.c.l.b16 %v410
  %v611 = vunpack.c.l.b16 %v411
  %v612 = vunpack.c.l.b16 %v412
  %v613 = vunpack.c.l.b16 %v413
  %v614 = vunpack.c.l.b16 %v414
  %v615 = vunpack.c.l.b16 %v415
  %v616 = vunpack.c.l.b16 %v416
  %v617 = vunpack.c.l.b16 %v417
  %v618 = vunpack.c.l.b16 %v418
  %v619 = vunpack.c.l.b16 %v419
  %v620 = vunpack.c.l.b16 %v420
  %v621 = vunpack.c.l.b16 %v421
  %v622 = vunpack.c.l.b16 %v422
  %v623 = vunpack.c.l.b16 %v423
  %v624 = vunpack.c.l.b16 %v424
  %v625 = vunpack.c.l.b16 %v425
  %v626 = vunpack.c.l.b16 %v426
  %v627 = vunpack.c.l.b16 %v427
  %v628 = vunpack.c.l.b16 %v428
  %v629 = vunpack.c.l.b16 %v429
  %v630 = vunpack.c.l.b16 %v430
  %v631 = vunpack.c.l.b16 %v431
  %v632 = vunpack.c.l.b16 %v432
  %v633 = vunpack.c.l.b16 %v433
  %v634 = vunpack.c.l.b16 %v434
  %v635 = vunpack.c.l.b16 %v435
  %v636 = vunpack.c.l.b16 %v436
  %v637 = vunpack.c.l.b16 %v437
  %v638 = vunpack.c.l.b16 %v438
  %v639 = vunpack.c.l.b16 %v439
  %v640 = vunpack.c.l.b16 %v440
  %v641 = vunpack.c.l.b16 %v441
  %v642 = vunpack.c.l.b16 %v442
  %v643 = vunpack.c.l.b16 %v443
  %v644 = vunpack.c.l.b16 %v444
  %v645 = vunpack.c.l.b16 %v445
  %v646 = vunpack.c.l.b16 %v446
  %v647 = vunpack.c.l.b16 %v447
  %v648 = vunpack.c.l.b16 %v448
  %v649 = vunpack.c.l.b16 %v449
  %v650 = vunpack.c.l.b16 %v450
  %v651 = vunpack.c.l.b16 %v451
  %v652 = vunpack.c.l.b16 %v452
  %v653 = vunpack.c.l.b16 %v453
  %v654 = vunpack.c.l.b16 %v454
  %v655 = vunpack.c.l.b16 %v455
  %v656 = vpack.c.b16 %v559, %v558
  %v657 = vpack.c.b16 %v561, %v560
  %v658 = vpack.c.b16 %v563, %v562
  %v659 = vpack.c.b16 %v565, %v564
  %v660 = vpack.c.b16 %v567, %v566
  %v661 = vpack.c.b16 %v569, %v568
  %v662 = vpack.c.b16 %v571, %v570
  %v663 = vpack.c.b16 %v573, %v572
  %v664 = vpack.c.b16 %v575, %v574
  %v665 = vpack.c.b16 %v577, %v576
  %v666 = vpack.c.b16 %v579, %v578
  %v667 = vpack.c.b16 %v581, %v580
  %v668 = vpack.c.b16 %v583, %v582
  %v669 = vpack.c.b16 %v585, %v584
  %v670 = vpack.c.b16 %v587, %v586
  %v671 = vpack.c.b16 %v589, %v588
  %v672 = vpack.c.b16 %v591, %v590
  %v673 = vpack.c.b16 %v593, %v592
  %v674 = vpack.c.b16 %v595, %v594
  %v675 = vpack.c.b16 %v597, %v596
  %v676 = vpack.c.b16 %v599, %v598
  %v677 = vpack.c.b16 %v601, %v600
  %v678 = vpack.c.b16 %v603, %v602
  %v679 = vpack.c.b16 %v605, %v604
  %v680 = vpack.c.b16 %v607, %v606
  %v681 = vpack.c.b16 %v609, %v608
  %v682 = vpack.c.b16 %v611, %v610
  %v683 = vpack.c.b16 %v613, %v612
  %v684 = vpack.c.b16 %v615, %v614
  %v685 = vpack.c.b16 %v617, %v616
  %v686 = vpack.c.b16 %v619, %v618
  %v687 = vpack.c.b16 %v621, %v620
  %v688 = vpack.c.b16 %v623, %v622
  %v689 = vpack.c.b16 %v625, %v624
  %v690 = vpack.c.b16 %v627, %v626
  %v691 = vpack.c.b16 %v629, %v628
  %v692 = vpack.c.b16 %v631, %v630
  %v693 = vpack.c.b16 %v633, %v632
  %v694 = vpack.c.b16 %v635, %v634
  %v695 = vpack.c.b16 %v637, %v636
  %v696 = vpack.c.b16 %v639, %v638
  %v697 = vpack.c.b16 %v641, %v640
  %v698 = vpack.c.b16 %v643, %v642
  %v699 = vpack.c.b16 %v645, %v644
  %v700 = vpack.c.b16 %v647, %v646
  %v701 = vpack.c.b16 %v649, %v648
  %v702 = vpack.c.b16 %v651, %v650
  %v703 = vpack.c.b16 %v653, %v652
  %v704 = vpack.c.b16 %v655, %v654
  %vm754 = vcmask 130048
  %v756 = vsel %vm754, %v251, 0
  %v759 = vsel %vm754, %v258, 0
  %v762 = vsel %vm754, %v265, 0
  %v765 = vsel %vm754, %v272, 0
  %v768 = vsel %vm754, %v279, 0
  %v771 = vsel %vm754, %v286, 0
  %v774 = vsel %vm754, %v293, 0
  %v777 = vsel %vm754, %v300, 0
  %v780 = vsel %vm754, %v307, 0
  %v783 = vsel %vm754, %v314, 0
  %v786 = vsel %vm754, %v321, 0
  %v789 = vsel %vm754, %v328, 0
  %v792 = vsel %vm754, %v335, 0
  %v795 = vsel %vm754, %v342, 0
  %v798 = vsel %vm754, %v349, 0
  %v801 = vsel %vm754, %v356, 0
  %803 = vmatprep.subr.bf16.mxu0 0
  %804 = vmatpush1.bf16.msra.mxu0 %v656
  %805 = vmatprep.subr.bf16.mxu0 0
  %806 = vmatpush1.bf16.msra.mxu0 %v657
  %807 = vmatprep.subr.bf16.mxu0 0
  %808 = vmatpush1.bf16.msra.mxu0 %v658
  %809 = vmatprep.subr.bf16.mxu0 0
  %810 = vmatpush1.bf16.msra.mxu0 %v659
  %811 = vmatprep.subr.bf16.mxu0 0
  %812 = vmatpush1.bf16.msra.mxu0 %v660
  %813 = vmatprep.subr.bf16.mxu0 0
  %814 = vmatpush1.bf16.msra.mxu0 %v661
  %815 = vmatprep.subr.bf16.mxu0 0
  %816 = vmatpush1.bf16.msra.mxu0 %v662
  %817 = vmatprep.subr.bf16.mxu0 0
  %818 = vmatpush1.bf16.msra.mxu0 %v663
  %819 = vmatprep.subr.bf16.mxu0 0
  %820 = vmatpush1.bf16.msra.mxu0 %v664
  %821 = vmatprep.subr.bf16.mxu0 0
  %822 = vmatpush1.bf16.msra.mxu0 %v665
  %823 = vmatprep.subr.bf16.mxu0 0
  %824 = vmatpush1.bf16.msra.mxu0 %v666
  %825 = vmatprep.subr.bf16.mxu0 0
  %826 = vmatpush1.bf16.msra.mxu0 %v667
  %827 = vmatprep.subr.bf16.mxu0 0
  %828 = vmatpush1.bf16.msra.mxu0 %v668
  %829 = vmatprep.subr.bf16.mxu0 0
  %830 = vmatpush1.bf16.msra.mxu0 %v669
  %831 = vmatprep.subr.bf16.mxu0 0
  %832 = vmatpush1.bf16.msra.mxu0 %v670
  %833 = vmatprep.subr.bf16.mxu0 0
  %834 = vmatpush1.bf16.msra.mxu0 %v671
  %835 = vmatprep.mubr.bf16.mxu0 %v246
  %836 = vmatmul.mubr.bf16.gmra.mrb[0].mxu0 %v245
  %v837 = vpop.f32.mrb[0].mxu0
  %v838 = vadd.f32 %v459, %v837
  %v839 = vpop.f32.mrb[0].mxu0
  %v840 = vpop.f32.mrb[0].mxu0
  %v841 = vadd.f32 %v459, %v840
  %v842 = vpop.f32.mrb[0].mxu0
  %843 = vmatprep.mubr.bf16.mxu0 %v253
  %844 = vmatmul.mubr.bf16.gmra.mrb[0].mxu0 %v252
  %v845 = vpop.f32.mrb[0].mxu0
  %v846 = vadd.f32 %v459, %v845
  %v847 = vpop.f32.mrb[0].mxu0
  %v848 = vpop.f32.mrb[0].mxu0
  %v849 = vadd.f32 %v459, %v848
  %v850 = vpop.f32.mrb[0].mxu0
  %851 = vmatprep.mubr.bf16.mxu0 %v260
  %852 = vmatmul.mubr.bf16.gmra.mrb[0].mxu0 %v259
  %v853 = vpop.f32.mrb[0].mxu0
  %v854 = vadd.f32 %v459, %v853
  %v855 = vpop.f32.mrb[0].mxu0
  %v856 = vpop.f32.mrb[0].mxu0
  %v857 = vadd.f32 %v459, %v856
  %v858 = vpop.f32.mrb[0].mxu0
  %859 = vmatprep.mubr.bf16.mxu0 %v267
  %860 = vmatmul.mubr.bf16.gmra.mrb[0].mxu0 %v266
  %v861 = vpop.f32.mrb[0].mxu0
  %v862 = vadd.f32 %v459, %v861
  %v863 = vpop.f32.mrb[0].mxu0
  %v864 = vpop.f32.mrb[0].mxu0
  %v865 = vadd.f32 %v459, %v864
  %v866 = vpop.f32.mrb[0].mxu0
  %867 = vmatprep.mubr.bf16.mxu0 %v274
  %868 = vmatmul.mubr.bf16.gmra.mrb[0].mxu0 %v273
  %v869 = vpop.f32.mrb[0].mxu0
  %v870 = vadd.f32 %v459, %v869
  %v871 = vpop.f32.mrb[0].mxu0
  %v872 = vpop.f32.mrb[0].mxu0
  %v873 = vadd.f32 %v459, %v872
  %v874 = vpop.f32.mrb[0].mxu0
  %875 = vmatprep.mubr.bf16.mxu0 %v281
  %876 = vmatmul.mubr.bf16.gmra.mrb[0].mxu0 %v280
  %v877 = vpop.f32.mrb[0].mxu0
  %v878 = vadd.f32 %v459, %v877
  %v879 = vpop.f32.mrb[0].mxu0
  %v880 = vpop.f32.mrb[0].mxu0
  %v881 = vadd.f32 %v459, %v880
  %v882 = vpop.f32.mrb[0].mxu0
  %883 = vmatprep.mubr.bf16.mxu0 %v288
  %884 = vmatmul.mubr.bf16.gmra.mrb[0].mxu0 %v287
  %v885 = vpop.f32.mrb[0].mxu0
  %v886 = vadd.f32 %v459, %v885
  %v887 = vpop.f32.mrb[0].mxu0
  %v888 = vpop.f32.mrb[0].mxu0
  %v889 = vadd.f32 %v459, %v888
  %v890 = vpop.f32.mrb[0].mxu0
  %891 = vmatprep.mubr.bf16.mxu0 %v295
  %892 = vmatmul.mubr.bf16.gmra.mrb[0].mxu0 %v294
  %v893 = vpop.f32.mrb[0].mxu0
  %v894 = vadd.f32 %v459, %v893
  %v895 = vpop.f32.mrb[0].mxu0
  %v896 = vpop.f32.mrb[0].mxu0
  %v897 = vadd.f32 %v459, %v896
  %v898 = vpop.f32.mrb[0].mxu0
  %899 = vmatprep.mubr.bf16.mxu0 %v302
  %900 = vmatmul.mubr.bf16.gmra.mrb[0].mxu0 %v301
  %v901 = vpop.f32.mrb[0].mxu0
  %v902 = vadd.f32 %v459, %v901
  %v903 = vpop.f32.mrb[0].mxu0
  %v904 = vpop.f32.mrb[0].mxu0
  %v905 = vadd.f32 %v459, %v904
  %v906 = vpop.f32.mrb[0].mxu0
  %907 = vmatprep.mubr.bf16.mxu0 %v309
  %908 = vmatmul.mubr.bf16.gmra.mrb[0].mxu0 %v308
  %v909 = vpop.f32.mrb[0].mxu0
  %v910 = vadd.f32 %v459, %v909
  %v911 = vpop.f32.mrb[0].mxu0
  %v912 = vpop.f32.mrb[0].mxu0
  %v913 = vadd.f32 %v459, %v912
  %v914 = vpop.f32.mrb[0].mxu0
  %915 = vmatprep.mubr.bf16.mxu0 %v316
  %916 = vmatmul.mubr.bf16.gmra.mrb[0].mxu0 %v315
  %v917 = vpop.f32.mrb[0].mxu0
  %v918 = vadd.f32 %v459, %v917
  %v919 = vpop.f32.mrb[0].mxu0
  %v920 = vpop.f32.mrb[0].mxu0
  %v921 = vadd.f32 %v459, %v920
  %v922 = vpop.f32.mrb[0].mxu0
  %923 = vmatprep.mubr.bf16.mxu0 %v323
  %924 = vmatmul.mubr.bf16.gmra.mrb[0].mxu0 %v322
  %v925 = vpop.f32.mrb[0].mxu0
  %v926 = vadd.f32 %v459, %v925
  %v927 = vpop.f32.mrb[0].mxu0
  %v928 = vpop.f32.mrb[0].mxu0
  %v929 = vadd.f32 %v459, %v928
  %v930 = vpop.f32.mrb[0].mxu0
  %931 = vmatprep.mubr.bf16.mxu0 %v330
  %932 = vmatmul.mubr.bf16.gmra.mrb[0].mxu0 %v329
  %v933 = vpop.f32.mrb[0].mxu0
  %v934 = vadd.f32 %v459, %v933
  %v935 = vpop.f32.mrb[0].mxu0
  %v936 = vpop.f32.mrb[0].mxu0
  %v937 = vadd.f32 %v459, %v936
  %v938 = vpop.f32.mrb[0].mxu0
  %939 = vmatprep.mubr.bf16.mxu0 %v337
  %940 = vmatmul.mubr.bf16.gmra.mrb[0].mxu0 %v336
  %v941 = vpop.f32.mrb[0].mxu0
  %v942 = vadd.f32 %v459, %v941
  %v943 = vpop.f32.mrb[0].mxu0
  %v944 = vpop.f32.mrb[0].mxu0
  %v945 = vadd.f32 %v459, %v944
  %v946 = vpop.f32.mrb[0].mxu0
  %947 = vmatprep.mubr.bf16.mxu0 %v344
  %948 = vmatmul.mubr.bf16.gmra.mrb[0].mxu0 %v343
  %v949 = vpop.f32.mrb[0].mxu0
  %v950 = vadd.f32 %v459, %v949
  %v951 = vpop.f32.mrb[0].mxu0
  %v952 = vpop.f32.mrb[0].mxu0
  %v953 = vadd.f32 %v459, %v952
  %v954 = vpop.f32.mrb[0].mxu0
  %955 = vmatprep.mubr.bf16.mxu0 %v351
  %956 = vmatmul.mubr.bf16.gmra.mrb[0].mxu0 %v350
  %v957 = vpop.f32.mrb[0].mxu0
  %v958 = vadd.f32 %v459, %v957
  %v959 = vpop.f32.mrb[0].mxu0
  %v960 = vpop.f32.mrb[0].mxu0
  %v961 = vadd.f32 %v459, %v960
  %v962 = vpop.f32.mrb[0].mxu0
  %963 = vdwg.mxu0
  %964 = vmatprep.subr.bf16.mxu0 0
  %965 = vmatpush1.bf16.msra.mxu0 %v672
  %966 = vmatprep.subr.bf16.mxu0 0
  %967 = vmatpush1.bf16.msra.mxu0 %v673
  %968 = vmatprep.subr.bf16.mxu0 0
  %969 = vmatpush1.bf16.msra.mxu0 %v674
  %970 = vmatprep.subr.bf16.mxu0 0
  %971 = vmatpush1.bf16.msra.mxu0 %v675
  %972 = vmatprep.subr.bf16.mxu0 0
  %973 = vmatpush1.bf16.msra.mxu0 %v676
  %974 = vmatprep.subr.bf16.mxu0 0
  %975 = vmatpush1.bf16.msra.mxu0 %v677
  %976 = vmatprep.subr.bf16.mxu0 0
  %977 = vmatpush1.bf16.msra.mxu0 %v678
  %978 = vmatprep.subr.bf16.mxu0 0
  %979 = vmatpush1.bf16.msra.mxu0 %v679
  %980 = vmatprep.subr.bf16.mxu0 0
  %981 = vmatpush1.bf16.msra.mxu0 %v680
  %982 = vmatprep.subr.bf16.mxu0 0
  %983 = vmatpush1.bf16.msra.mxu0 %v681
  %984 = vmatprep.subr.bf16.mxu0 0
  %985 = vmatpush1.bf16.msra.mxu0 %v682
  %986 = vmatprep.subr.bf16.mxu0 0
  %987 = vmatpush1.bf16.msra.mxu0 %v683
  %988 = vmatprep.subr.bf16.mxu0 0
  %989 = vmatpush1.bf16.msra.mxu0 %v684
  %990 = vmatprep.subr.bf16.mxu0 0
  %991 = vmatpush1.bf16.msra.mxu0 %v685
  %992 = vmatprep.subr.bf16.mxu0 0
  %993 = vmatpush1.bf16.msra.mxu0 %v686
  %994 = vmatprep.subr.bf16.mxu0 0
  %995 = vmatpush1.bf16.msra.mxu0 %v687
  %996 = vmatprep.mubr.bf16.mxu0 %v248
  %997 = vmatmul.mubr.bf16.gmra.mrb[0].mxu0 %v247
  %v998 = vpop.f32.mrb[0].mxu0
  %v999 = vadd.f32 %v838, %v998
  %v1000 = vpop.f32.mrb[0].mxu0
  %v1001 = vpop.f32.mrb[0].mxu0
  %v1002 = vadd.f32 %v841, %v1001
  %v1003 = vpop.f32.mrb[0].mxu0
  %1004 = vmatprep.mubr.bf16.mxu0 %v255
  %1005 = vmatmul.mubr.bf16.gmra.mrb[0].mxu0 %v254
  %v1006 = vpop.f32.mrb[0].mxu0
  %v1007 = vadd.f32 %v846, %v1006
  %v1008 = vpop.f32.mrb[0].mxu0
  %v1009 = vpop.f32.mrb[0].mxu0
  %v1010 = vadd.f32 %v849, %v1009
  %v1011 = vpop.f32.mrb[0].mxu0
  %1012 = vmatprep.mubr.bf16.mxu0 %v262
  %1013 = vmatmul.mubr.bf16.gmra.mrb[0].mxu0 %v261
  %v1014 = vpop.f32.mrb[0].mxu0
  %v1015 = vadd.f32 %v854, %v1014
  %v1016 = vpop.f32.mrb[0].mxu0
  %v1017 = vpop.f32.mrb[0].mxu0
  %v1018 = vadd.f32 %v857, %v1017
  %v1019 = vpop.f32.mrb[0].mxu0
  %1020 = vmatprep.mubr.bf16.mxu0 %v269
  %1021 = vmatmul.mubr.bf16.gmra.mrb[0].mxu0 %v268
  %v1022 = vpop.f32.mrb[0].mxu0
  %v1023 = vadd.f32 %v862, %v1022
  %v1024 = vpop.f32.mrb[0].mxu0
  %v1025 = vpop.f32.mrb[0].mxu0
  %v1026 = vadd.f32 %v865, %v1025
  %v1027 = vpop.f32.mrb[0].mxu0
  %1028 = vmatprep.mubr.bf16.mxu0 %v276
  %1029 = vmatmul.mubr.bf16.gmra.mrb[0].mxu0 %v275
  %v1030 = vpop.f32.mrb[0].mxu0
  %v1031 = vadd.f32 %v870, %v1030
  %v1032 = vpop.f32.mrb[0].mxu0
  %v1033 = vpop.f32.mrb[0].mxu0
  %v1034 = vadd.f32 %v873, %v1033
  %v1035 = vpop.f32.mrb[0].mxu0
  %1036 = vmatprep.mubr.bf16.mxu0 %v283
  %1037 = vmatmul.mubr.bf16.gmra.mrb[0].mxu0 %v282
  %v1038 = vpop.f32.mrb[0].mxu0
  %v1039 = vadd.f32 %v878, %v1038
  %v1040 = vpop.f32.mrb[0].mxu0
  %v1041 = vpop.f32.mrb[0].mxu0
  %v1042 = vadd.f32 %v881, %v1041
  %v1043 = vpop.f32.mrb[0].mxu0
  %1044 = vmatprep.mubr.bf16.mxu0 %v290
  %1045 = vmatmul.mubr.bf16.gmra.mrb[0].mxu0 %v289
  %v1046 = vpop.f32.mrb[0].mxu0
  %v1047 = vadd.f32 %v886, %v1046
  %v1048 = vpop.f32.mrb[0].mxu0
  %v1049 = vpop.f32.mrb[0].mxu0
  %v1050 = vadd.f32 %v889, %v1049
  %v1051 = vpop.f32.mrb[0].mxu0
  %1052 = vmatprep.mubr.bf16.mxu0 %v297
  %1053 = vmatmul.mubr.bf16.gmra.mrb[0].mxu0 %v296
  %v1054 = vpop.f32.mrb[0].mxu0
  %v1055 = vadd.f32 %v894, %v1054
  %v1056 = vpop.f32.mrb[0].mxu0
  %v1057 = vpop.f32.mrb[0].mxu0
  %v1058 = vadd.f32 %v897, %v1057
  %v1059 = vpop.f32.mrb[0].mxu0
  %1060 = vmatprep.mubr.bf16.mxu0 %v304
  %1061 = vmatmul.mubr.bf16.gmra.mrb[0].mxu0 %v303
  %v1062 = vpop.f32.mrb[0].mxu0
  %v1063 = vadd.f32 %v902, %v1062
  %v1064 = vpop.f32.mrb[0].mxu0
  %v1065 = vpop.f32.mrb[0].mxu0
  %v1066 = vadd.f32 %v905, %v1065
  %v1067 = vpop.f32.mrb[0].mxu0
  %1068 = vmatprep.mubr.bf16.mxu0 %v311
  %1069 = vmatmul.mubr.bf16.gmra.mrb[0].mxu0 %v310
  %v1070 = vpop.f32.mrb[0].mxu0
  %v1071 = vadd.f32 %v910, %v1070
  %v1072 = vpop.f32.mrb[0].mxu0
  %v1073 = vpop.f32.mrb[0].mxu0
  %v1074 = vadd.f32 %v913, %v1073
  %v1075 = vpop.f32.mrb[0].mxu0
  %1076 = vmatprep.mubr.bf16.mxu0 %v318
  %1077 = vmatmul.mubr.bf16.gmra.mrb[0].mxu0 %v317
  %v1078 = vpop.f32.mrb[0].mxu0
  %v1079 = vadd.f32 %v918, %v1078
  %v1080 = vpop.f32.mrb[0].mxu0
  %v1081 = vpop.f32.mrb[0].mxu0
  %v1082 = vadd.f32 %v921, %v1081
  %v1083 = vpop.f32.mrb[0].mxu0
  %1084 = vmatprep.mubr.bf16.mxu0 %v325
  %1085 = vmatmul.mubr.bf16.gmra.mrb[0].mxu0 %v324
  %v1086 = vpop.f32.mrb[0].mxu0
  %v1087 = vadd.f32 %v926, %v1086
  %v1088 = vpop.f32.mrb[0].mxu0
  %v1089 = vpop.f32.mrb[0].mxu0
  %v1090 = vadd.f32 %v929, %v1089
  %v1091 = vpop.f32.mrb[0].mxu0
  %1092 = vmatprep.mubr.bf16.mxu0 %v332
  %1093 = vmatmul.mubr.bf16.gmra.mrb[0].mxu0 %v331
  %v1094 = vpop.f32.mrb[0].mxu0
  %v1095 = vadd.f32 %v934, %v1094
  %v1096 = vpop.f32.mrb[0].mxu0
  %v1097 = vpop.f32.mrb[0].mxu0
  %v1098 = vadd.f32 %v937, %v1097
  %v1099 = vpop.f32.mrb[0].mxu0
  %1100 = vmatprep.mubr.bf16.mxu0 %v339
  %1101 = vmatmul.mubr.bf16.gmra.mrb[0].mxu0 %v338
  %v1102 = vpop.f32.mrb[0].mxu0
  %v1103 = vadd.f32 %v942, %v1102
  %v1104 = vpop.f32.mrb[0].mxu0
  %v1105 = vpop.f32.mrb[0].mxu0
  %v1106 = vadd.f32 %v945, %v1105
  %v1107 = vpop.f32.mrb[0].mxu0
  %1108 = vmatprep.mubr.bf16.mxu0 %v346
  %1109 = vmatmul.mubr.bf16.gmra.mrb[0].mxu0 %v345
  %v1110 = vpop.f32.mrb[0].mxu0
  %v1111 = vadd.f32 %v950, %v1110
  %v1112 = vpop.f32.mrb[0].mxu0
  %v1113 = vpop.f32.mrb[0].mxu0
  %v1114 = vadd.f32 %v953, %v1113
  %v1115 = vpop.f32.mrb[0].mxu0
  %1116 = vmatprep.mubr.bf16.mxu0 %v353
  %1117 = vmatmul.mubr.bf16.gmra.mrb[0].mxu0 %v352
  %v1118 = vpop.f32.mrb[0].mxu0
  %v1119 = vadd.f32 %v958, %v1118
  %v1120 = vpop.f32.mrb[0].mxu0
  %v1121 = vpop.f32.mrb[0].mxu0
  %v1122 = vadd.f32 %v961, %v1121
  %v1123 = vpop.f32.mrb[0].mxu0
  %1124 = vdwg.mxu0
  %1125 = vmatprep.subr.bf16.mxu0 0
  %1126 = vmatpush1.bf16.msra.mxu0 %v688
  %1127 = vmatprep.subr.bf16.mxu0 0
  %1128 = vmatpush1.bf16.msra.mxu0 %v689
  %1129 = vmatprep.subr.bf16.mxu0 0
  %1130 = vmatpush1.bf16.msra.mxu0 %v690
  %1131 = vmatprep.subr.bf16.mxu0 0
  %1132 = vmatpush1.bf16.msra.mxu0 %v691
  %1133 = vmatprep.subr.bf16.mxu0 0
  %1134 = vmatpush1.bf16.msra.mxu0 %v692
  %1135 = vmatprep.subr.bf16.mxu0 0
  %1136 = vmatpush1.bf16.msra.mxu0 %v693
  %1137 = vmatprep.subr.bf16.mxu0 0
  %1138 = vmatpush1.bf16.msra.mxu0 %v694
  %1139 = vmatprep.subr.bf16.mxu0 0
  %1140 = vmatpush1.bf16.msra.mxu0 %v695
  %1141 = vmatprep.subr.bf16.mxu0 0
  %1142 = vmatpush1.bf16.msra.mxu0 %v696
  %1143 = vmatprep.subr.bf16.mxu0 0
  %1144 = vmatpush1.bf16.msra.mxu0 %v697
  %1145 = vmatprep.subr.bf16.mxu0 0
  %1146 = vmatpush1.bf16.msra.mxu0 %v698
  %1147 = vmatprep.subr.bf16.mxu0 0
  %1148 = vmatpush1.bf16.msra.mxu0 %v699
  %1149 = vmatprep.subr.bf16.mxu0 0
  %1150 = vmatpush1.bf16.msra.mxu0 %v700
  %1151 = vmatprep.subr.bf16.mxu0 0
  %1152 = vmatpush1.bf16.msra.mxu0 %v701
  %1153 = vmatprep.subr.bf16.mxu0 0
  %1154 = vmatpush1.bf16.msra.mxu0 %v702
  %1155 = vmatprep.subr.bf16.mxu0 0
  %1156 = vmatpush1.bf16.msra.mxu0 %v703
  %1157 = vmatprep.mubr.bf16.mxu0 %v250
  %1158 = vmatmul.mubr.bf16.gmra.mrb[0].mxu0 %v249
  %v1159 = vpop.f32.mrb[0].mxu0
  %v1160 = vadd.f32 %v999, %v1159
  %v1161 = vpop.f32.mrb[0].mxu0
  %v1162 = vpop.f32.mrb[0].mxu0
  %v1163 = vadd.f32 %v1002, %v1162
  %v1164 = vpop.f32.mrb[0].mxu0
  %1165 = vmatprep.mubr.bf16.mxu0 %v257
  %1166 = vmatmul.mubr.bf16.gmra.mrb[0].mxu0 %v256
  %v1167 = vpop.f32.mrb[0].mxu0
  %v1168 = vadd.f32 %v1007, %v1167
  %v1169 = vpop.f32.mrb[0].mxu0
  %v1170 = vpop.f32.mrb[0].mxu0
  %v1171 = vadd.f32 %v1010, %v1170
  %v1172 = vpop.f32.mrb[0].mxu0
  %1173 = vmatprep.mubr.bf16.mxu0 %v264
  %1174 = vmatmul.mubr.bf16.gmra.mrb[0].mxu0 %v263
  %v1175 = vpop.f32.mrb[0].mxu0
  %v1176 = vadd.f32 %v1015, %v1175
  %v1177 = vpop.f32.mrb[0].mxu0
  %v1178 = vpop.f32.mrb[0].mxu0
  %v1179 = vadd.f32 %v1018, %v1178
  %v1180 = vpop.f32.mrb[0].mxu0
  %1181 = vmatprep.mubr.bf16.mxu0 %v271
  %1182 = vmatmul.mubr.bf16.gmra.mrb[0].mxu0 %v270
  %v1183 = vpop.f32.mrb[0].mxu0
  %v1184 = vadd.f32 %v1023, %v1183
  %v1185 = vpop.f32.mrb[0].mxu0
  %v1186 = vpop.f32.mrb[0].mxu0
  %v1187 = vadd.f32 %v1026, %v1186
  %v1188 = vpop.f32.mrb[0].mxu0
  %1189 = vmatprep.mubr.bf16.mxu0 %v278
  %1190 = vmatmul.mubr.bf16.gmra.mrb[0].mxu0 %v277
  %v1191 = vpop.f32.mrb[0].mxu0
  %v1192 = vadd.f32 %v1031, %v1191
  %v1193 = vpop.f32.mrb[0].mxu0
  %v1194 = vpop.f32.mrb[0].mxu0
  %v1195 = vadd.f32 %v1034, %v1194
  %v1196 = vpop.f32.mrb[0].mxu0
  %1197 = vmatprep.mubr.bf16.mxu0 %v285
  %1198 = vmatmul.mubr.bf16.gmra.mrb[0].mxu0 %v284
  %v1199 = vpop.f32.mrb[0].mxu0
  %v1200 = vadd.f32 %v1039, %v1199
  %v1201 = vpop.f32.mrb[0].mxu0
  %v1202 = vpop.f32.mrb[0].mxu0
  %v1203 = vadd.f32 %v1042, %v1202
  %v1204 = vpop.f32.mrb[0].mxu0
  %1205 = vmatprep.mubr.bf16.mxu0 %v292
  %1206 = vmatmul.mubr.bf16.gmra.mrb[0].mxu0 %v291
  %v1207 = vpop.f32.mrb[0].mxu0
  %v1208 = vadd.f32 %v1047, %v1207
  %v1209 = vpop.f32.mrb[0].mxu0
  %v1210 = vpop.f32.mrb[0].mxu0
  %v1211 = vadd.f32 %v1050, %v1210
  %v1212 = vpop.f32.mrb[0].mxu0
  %1213 = vmatprep.mubr.bf16.mxu0 %v299
  %1214 = vmatmul.mubr.bf16.gmra.mrb[0].mxu0 %v298
  %v1215 = vpop.f32.mrb[0].mxu0
  %v1216 = vadd.f32 %v1055, %v1215
  %v1217 = vpop.f32.mrb[0].mxu0
  %v1218 = vpop.f32.mrb[0].mxu0
  %v1219 = vadd.f32 %v1058, %v1218
  %v1220 = vpop.f32.mrb[0].mxu0
  %1221 = vmatprep.mubr.bf16.mxu0 %v306
  %1222 = vmatmul.mubr.bf16.gmra.mrb[0].mxu0 %v305
  %v1223 = vpop.f32.mrb[0].mxu0
  %v1224 = vadd.f32 %v1063, %v1223
  %v1225 = vpop.f32.mrb[0].mxu0
  %v1226 = vpop.f32.mrb[0].mxu0
  %v1227 = vadd.f32 %v1066, %v1226
  %v1228 = vpop.f32.mrb[0].mxu0
  %1229 = vmatprep.mubr.bf16.mxu0 %v313
  %1230 = vmatmul.mubr.bf16.gmra.mrb[0].mxu0 %v312
  %v1231 = vpop.f32.mrb[0].mxu0
  %v1232 = vadd.f32 %v1071, %v1231
  %v1233 = vpop.f32.mrb[0].mxu0
  %v1234 = vpop.f32.mrb[0].mxu0
  %v1235 = vadd.f32 %v1074, %v1234
  %v1236 = vpop.f32.mrb[0].mxu0
  %1237 = vmatprep.mubr.bf16.mxu0 %v320
  %1238 = vmatmul.mubr.bf16.gmra.mrb[0].mxu0 %v319
  %v1239 = vpop.f32.mrb[0].mxu0
  %v1240 = vadd.f32 %v1079, %v1239
  %v1241 = vpop.f32.mrb[0].mxu0
  %v1242 = vpop.f32.mrb[0].mxu0
  %v1243 = vadd.f32 %v1082, %v1242
  %v1244 = vpop.f32.mrb[0].mxu0
  %1245 = vmatprep.mubr.bf16.mxu0 %v327
  %1246 = vmatmul.mubr.bf16.gmra.mrb[0].mxu0 %v326
  %v1247 = vpop.f32.mrb[0].mxu0
  %v1248 = vadd.f32 %v1087, %v1247
  %v1249 = vpop.f32.mrb[0].mxu0
  %v1250 = vpop.f32.mrb[0].mxu0
  %v1251 = vadd.f32 %v1090, %v1250
  %v1252 = vpop.f32.mrb[0].mxu0
  %1253 = vmatprep.mubr.bf16.mxu0 %v334
  %1254 = vmatmul.mubr.bf16.gmra.mrb[0].mxu0 %v333
  %v1255 = vpop.f32.mrb[0].mxu0
  %v1256 = vadd.f32 %v1095, %v1255
  %v1257 = vpop.f32.mrb[0].mxu0
  %v1258 = vpop.f32.mrb[0].mxu0
  %v1259 = vadd.f32 %v1098, %v1258
  %v1260 = vpop.f32.mrb[0].mxu0
  %1261 = vmatprep.mubr.bf16.mxu0 %v341
  %1262 = vmatmul.mubr.bf16.gmra.mrb[0].mxu0 %v340
  %v1263 = vpop.f32.mrb[0].mxu0
  %v1264 = vadd.f32 %v1103, %v1263
  %v1265 = vpop.f32.mrb[0].mxu0
  %v1266 = vpop.f32.mrb[0].mxu0
  %v1267 = vadd.f32 %v1106, %v1266
  %v1268 = vpop.f32.mrb[0].mxu0
  %1269 = vmatprep.mubr.bf16.mxu0 %v348
  %1270 = vmatmul.mubr.bf16.gmra.mrb[0].mxu0 %v347
  %v1271 = vpop.f32.mrb[0].mxu0
  %v1272 = vadd.f32 %v1111, %v1271
  %v1273 = vpop.f32.mrb[0].mxu0
  %v1274 = vpop.f32.mrb[0].mxu0
  %v1275 = vadd.f32 %v1114, %v1274
  %v1276 = vpop.f32.mrb[0].mxu0
  %1277 = vmatprep.mubr.bf16.mxu0 %v355
  %1278 = vmatmul.mubr.bf16.gmra.mrb[0].mxu0 %v354
  %v1279 = vpop.f32.mrb[0].mxu0
  %v1280 = vadd.f32 %v1119, %v1279
  %v1281 = vpop.f32.mrb[0].mxu0
  %v1282 = vpop.f32.mrb[0].mxu0
  %v1283 = vadd.f32 %v1122, %v1282
  %v1284 = vpop.f32.mrb[0].mxu0
  %1285 = vdwg.mxu0
  %1286 = vmatprep.subr.bf16.mxu0 0
  %1287 = vmatpush1.bf16.msra.mxu0 %v704
  %1288 = vmatprep.subr.bf16.mxu0 0
  %1289 = vmatpush1.bf16.msra.mxu0 0
  %1290 = vmatprep.subr.bf16.mxu0 0
  %1291 = vmatpush1.bf16.msra.mxu0 0
  %1292 = vmatprep.subr.bf16.mxu0 0
  %1293 = vmatpush1.bf16.msra.mxu0 0
  %1294 = vmatprep.subr.bf16.mxu0 0
  %1295 = vmatpush1.bf16.msra.mxu0 0
  %1296 = vmatprep.subr.bf16.mxu0 0
  %1297 = vmatpush1.bf16.msra.mxu0 0
  %1298 = vmatprep.subr.bf16.mxu0 0
  %1299 = vmatpush1.bf16.msra.mxu0 0
  %1300 = vmatprep.subr.bf16.mxu0 0
  %1301 = vmatpush1.bf16.msra.mxu0 0
  %1302 = vmatprep.subr.bf16.mxu0 0
  %1303 = vmatpush1.bf16.msra.mxu0 0
  %1304 = vmatprep.subr.bf16.mxu0 0
  %1305 = vmatpush1.bf16.msra.mxu0 0
  %1306 = vmatprep.subr.bf16.mxu0 0
  %1307 = vmatpush1.bf16.msra.mxu0 0
  %1308 = vmatprep.subr.bf16.mxu0 0
  %1309 = vmatpush1.bf16.msra.mxu0 0
  %1310 = vmatprep.subr.bf16.mxu0 0
  %1311 = vmatpush1.bf16.msra.mxu0 0
  %1312 = vmatprep.subr.bf16.mxu0 0
  %1313 = vmatpush1.bf16.msra.mxu0 0
  %1314 = vmatprep.subr.bf16.mxu0 0
  %1315 = vmatpush1.bf16.msra.mxu0 0
  %1316 = vmatprep.subr.bf16.mxu0 0
  %1317 = vmatpush1.bf16.msra.mxu0 0
  %1318 = vmatprep.mubr.bf16.mxu0 0
  %1319 = vmatmul.mubr.bf16.gmra.mrb[0].mxu0 %v756
  %v1320 = vpop.f32.mrb[0].mxu0
  %v1321 = vadd.f32 %v1160, %v1320
  %v1322 = vpop.f32.mrb[0].mxu0
  %v1323 = vpop.f32.mrb[0].mxu0
  %v1324 = vadd.f32 %v1163, %v1323
  %v1325 = vpop.f32.mrb[0].mxu0
  %1326 = vmatprep.mubr.bf16.mxu0 0
  %1327 = vmatmul.mubr.bf16.gmra.mrb[0].mxu0 %v759
  %v1328 = vpop.f32.mrb[0].mxu0
  %v1329 = vadd.f32 %v1168, %v1328
  %v1330 = vpop.f32.mrb[0].mxu0
  %v1331 = vpop.f32.mrb[0].mxu0
  %v1332 = vadd.f32 %v1171, %v1331
  %v1333 = vpop.f32.mrb[0].mxu0
  %1334 = vmatprep.mubr.bf16.mxu0 0
  %1335 = vmatmul.mubr.bf16.gmra.mrb[0].mxu0 %v762
  %v1336 = vpop.f32.mrb[0].mxu0
  %v1337 = vadd.f32 %v1176, %v1336
  %v1338 = vpop.f32.mrb[0].mxu0
  %v1339 = vpop.f32.mrb[0].mxu0
  %v1340 = vadd.f32 %v1179, %v1339
  %v1341 = vpop.f32.mrb[0].mxu0
  %1342 = vmatprep.mubr.bf16.mxu0 0
  %1343 = vmatmul.mubr.bf16.gmra.mrb[0].mxu0 %v765
  %v1344 = vpop.f32.mrb[0].mxu0
  %v1345 = vadd.f32 %v1184, %v1344
  %v1346 = vpop.f32.mrb[0].mxu0
  %v1347 = vpop.f32.mrb[0].mxu0
  %v1348 = vadd.f32 %v1187, %v1347
  %v1349 = vpop.f32.mrb[0].mxu0
  %1350 = vmatprep.mubr.bf16.mxu0 0
  %1351 = vmatmul.mubr.bf16.gmra.mrb[0].mxu0 %v768
  %v1352 = vpop.f32.mrb[0].mxu0
  %v1353 = vadd.f32 %v1192, %v1352
  %v1354 = vpop.f32.mrb[0].mxu0
  %v1355 = vpop.f32.mrb[0].mxu0
  %v1356 = vadd.f32 %v1195, %v1355
  %v1357 = vpop.f32.mrb[0].mxu0
  %1358 = vmatprep.mubr.bf16.mxu0 0
  %1359 = vmatmul.mubr.bf16.gmra.mrb[0].mxu0 %v771
  %v1360 = vpop.f32.mrb[0].mxu0
  %v1361 = vadd.f32 %v1200, %v1360
  %v1362 = vpop.f32.mrb[0].mxu0
  %v1363 = vpop.f32.mrb[0].mxu0
  %v1364 = vadd.f32 %v1203, %v1363
  %v1365 = vpop.f32.mrb[0].mxu0
  %1366 = vmatprep.mubr.bf16.mxu0 0
  %1367 = vmatmul.mubr.bf16.gmra.mrb[0].mxu0 %v774
  %v1368 = vpop.f32.mrb[0].mxu0
  %v1369 = vadd.f32 %v1208, %v1368
  %v1370 = vpop.f32.mrb[0].mxu0
  %v1371 = vpop.f32.mrb[0].mxu0
  %v1372 = vadd.f32 %v1211, %v1371
  %v1373 = vpop.f32.mrb[0].mxu0
  %1374 = vmatprep.mubr.bf16.mxu0 0
  %1375 = vmatmul.mubr.bf16.gmra.mrb[0].mxu0 %v777
  %v1376 = vpop.f32.mrb[0].mxu0
  %v1377 = vadd.f32 %v1216, %v1376
  %v1378 = vpop.f32.mrb[0].mxu0
  %v1379 = vpop.f32.mrb[0].mxu0
  %v1380 = vadd.f32 %v1219, %v1379
  %v1381 = vpop.f32.mrb[0].mxu0
  %1382 = vmatprep.mubr.bf16.mxu0 0
  %1383 = vmatmul.mubr.bf16.gmra.mrb[0].mxu0 %v780
  %v1384 = vpop.f32.mrb[0].mxu0
  %v1385 = vadd.f32 %v1224, %v1384
  %v1386 = vpop.f32.mrb[0].mxu0
  %v1387 = vpop.f32.mrb[0].mxu0
  %v1388 = vadd.f32 %v1227, %v1387
  %v1389 = vpop.f32.mrb[0].mxu0
  %1390 = vmatprep.mubr.bf16.mxu0 0
  %1391 = vmatmul.mubr.bf16.gmra.mrb[0].mxu0 %v783
  %v1392 = vpop.f32.mrb[0].mxu0
  %v1393 = vadd.f32 %v1232, %v1392
  %v1394 = vpop.f32.mrb[0].mxu0
  %v1395 = vpop.f32.mrb[0].mxu0
  %v1396 = vadd.f32 %v1235, %v1395
  %v1397 = vpop.f32.mrb[0].mxu0
  %1398 = vmatprep.mubr.bf16.mxu0 0
  %1399 = vmatmul.mubr.bf16.gmra.mrb[0].mxu0 %v786
  %v1400 = vpop.f32.mrb[0].mxu0
  %v1401 = vadd.f32 %v1240, %v1400
  %v1402 = vpop.f32.mrb[0].mxu0
  %v1403 = vpop.f32.mrb[0].mxu0
  %v1404 = vadd.f32 %v1243, %v1403
  %v1405 = vpop.f32.mrb[0].mxu0
  %1406 = vmatprep.mubr.bf16.mxu0 0
  %1407 = vmatmul.mubr.bf16.gmra.mrb[0].mxu0 %v789
  %v1408 = vpop.f32.mrb[0].mxu0
  %v1409 = vadd.f32 %v1248, %v1408
  %v1410 = vpop.f32.mrb[0].mxu0
  %v1411 = vpop.f32.mrb[0].mxu0
  %v1412 = vadd.f32 %v1251, %v1411
  %v1413 = vpop.f32.mrb[0].mxu0
  %1414 = vmatprep.mubr.bf16.mxu0 0
  %1415 = vmatmul.mubr.bf16.gmra.mrb[0].mxu0 %v792
  %v1416 = vpop.f32.mrb[0].mxu0
  %v1417 = vadd.f32 %v1256, %v1416
  %v1418 = vpop.f32.mrb[0].mxu0
  %v1419 = vpop.f32.mrb[0].mxu0
  %v1420 = vadd.f32 %v1259, %v1419
  %v1421 = vpop.f32.mrb[0].mxu0
  %1422 = vmatprep.mubr.bf16.mxu0 0
  %1423 = vmatmul.mubr.bf16.gmra.mrb[0].mxu0 %v795
  %v1424 = vpop.f32.mrb[0].mxu0
  %v1425 = vadd.f32 %v1264, %v1424
  %v1426 = vpop.f32.mrb[0].mxu0
  %v1427 = vpop.f32.mrb[0].mxu0
  %v1428 = vadd.f32 %v1267, %v1427
  %v1429 = vpop.f32.mrb[0].mxu0
  %1430 = vmatprep.mubr.bf16.mxu0 0
  %1431 = vmatmul.mubr.bf16.gmra.mrb[0].mxu0 %v798
  %v1432 = vpop.f32.mrb[0].mxu0
  %v1433 = vadd.f32 %v1272, %v1432
  %v1434 = vpop.f32.mrb[0].mxu0
  %v1435 = vpop.f32.mrb[0].mxu0
  %v1436 = vadd.f32 %v1275, %v1435
  %v1437 = vpop.f32.mrb[0].mxu0
  %1438 = vmatprep.mubr.bf16.mxu0 0
  %1439 = vmatmul.mubr.bf16.gmra.mrb[0].mxu0 %v801
  %v1440 = vpop.f32.mrb[0].mxu0
  %v1441 = vadd.f32 %v1280, %v1440
  %v1442 = vpop.f32.mrb[0].mxu0
  %v1443 = vpop.f32.mrb[0].mxu0
  %v1444 = vadd.f32 %v1283, %v1443
  %v1445 = vpop.f32.mrb[0].mxu0
  %1446 = vdwg.mxu0
  %v1447 = vmax.f32 %v1321, 0.0
  %v1448 = vmax.f32 %v1324, 0.0
  %v1449 = vmax.f32 %v1329, 0.0
  %v1450 = vmax.f32 %v1332, 0.0
  %v1451 = vmax.f32 %v1337, 0.0
  %v1452 = vmax.f32 %v1340, 0.0
  %v1453 = vmax.f32 %v1345, 0.0
  %v1454 = vmax.f32 %v1348, 0.0
  %v1455 = vmax.f32 %v1353, 0.0
  %v1456 = vmax.f32 %v1356, 0.0
  %v1457 = vmax.f32 %v1361, 0.0
  %v1458 = vmax.f32 %v1364, 0.0
  %v1459 = vmax.f32 %v1369, 0.0
  %v1460 = vmax.f32 %v1372, 0.0
  %v1461 = vmax.f32 %v1377, 0.0
  %v1462 = vmax.f32 %v1380, 0.0
  %v1463 = vmax.f32 %v1385, 0.0
  %v1464 = vmax.f32 %v1388, 0.0
  %v1465 = vmax.f32 %v1393, 0.0
  %v1466 = vmax.f32 %v1396, 0.0
  %v1467 = vmax.f32 %v1401, 0.0
  %v1468 = vmax.f32 %v1404, 0.0
  %v1469 = vmax.f32 %v1409, 0.0
  %v1470 = vmax.f32 %v1412, 0.0
  %v1471 = vmax.f32 %v1417, 0.0
  %v1472 = vmax.f32 %v1420, 0.0
  %v1473 = vmax.f32 %v1425, 0.0
  %v1474 = vmax.f32 %v1428, 0.0
  %v1475 = vmax.f32 %v1433, 0.0
  %v1476 = vmax.f32 %v1436, 0.0
  %v1477 = vmax.f32 %v1441, 0.0
  %v1478 = vmax.f32 %v1444, 0.0
  %v1479 = vpack.c.bf16 %v1448, %v1447
  %v1480 = vpack.c.bf16 %v1450, %v1449
  %v1481 = vpack.c.bf16 %v1452, %v1451
  %v1482 = vpack.c.bf16 %v1454, %v1453
  %v1483 = vpack.c.bf16 %v1456, %v1455
  %v1484 = vpack.c.bf16 %v1458, %v1457
  %v1485 = vpack.c.bf16 %v1460, %v1459
  %v1486 = vpack.c.bf16 %v1462, %v1461
  %v1487 = vpack.c.bf16 %v1464, %v1463
  %v1488 = vpack.c.bf16 %v1466, %v1465
  %v1489 = vpack.c.bf16 %v1468, %v1467
  %v1490 = vpack.c.bf16 %v1470, %v1469
  %v1491 = vpack.c.bf16 %v1472, %v1471
  %v1492 = vpack.c.bf16 %v1474, %v1473
  %v1493 = vpack.c.bf16 %v1476, %v1475
  %v1494 = vpack.c.bf16 %v1478, %v1477
  %v1495 = vld [vmem:[%s2] sm:$0xf]
  %v1496 = vld [vmem:[%s2 + $0x4] sm:$0xf]
  %v1497 = vld [vmem:[%s2 + $0x8] sm:$0xf]
  %v1498 = vld [vmem:[%s2 + $0xc] sm:$0xf]
  %v1499 = vld [vmem:[%s2 + $0x10] sm:$0xf]
  %v1500 = vld [vmem:[%s2 + $0x14] sm:$0xf]
  %v1501 = vld [vmem:[%s2 + $0x18] sm:$0xf]
  %v1502 = vld [vmem:[%s2 + $0x1c] sm:$0xf]
  %v1503 = vld [vmem:[%s2 + $0x20] sm:$0xf]
  %v1504 = vld [vmem:[%s2 + $0x24] sm:$0xf]
  %v1505 = vld [vmem:[%s2 + $0x28] sm:$0xf]
  %v1506 = vld [vmem:[%s2 + $0x2c] sm:$0xf]
  %v1507 = vld [vmem:[%s2 + $0x30] sm:$0xf]
  %v1508 = vld [vmem:[%s2 + $0x34] sm:$0xf]
  %v1509 = vld [vmem:[%s2 + $0x38] sm:$0xf]
  %v1510 = vld [vmem:[%s2 + $0x3c] sm:$0xf]
  %v1511 = vlaneseq
  %v1512 = vshrl.u32 %v1511, 7
  %v1513 = vsub.s32 1, %v1512
  %v1514 = vrot.slane %v357, %v1513
  %v1531 = vunpack.c.l.b16 %v1495
  %v1532 = vunpack.c.l.b16 %v1496
  %v1533 = vunpack.c.l.b16 %v1497
  %v1534 = vunpack.c.l.b16 %v1498
  %v1535 = vunpack.c.l.b16 %v1499
  %v1536 = vunpack.c.l.b16 %v1500
  %v1537 = vunpack.c.l.b16 %v1501
  %v1538 = vunpack.c.l.b16 %v1502
  %v1539 = vunpack.c.l.b16 %v1503
  %v1540 = vunpack.c.l.b16 %v1504
  %v1541 = vunpack.c.l.b16 %v1505
  %v1542 = vunpack.c.l.b16 %v1506
  %v1543 = vunpack.c.l.b16 %v1507
  %v1544 = vunpack.c.l.b16 %v1508
  %v1545 = vunpack.c.l.b16 %v1509
  %v1546 = vunpack.c.l.b16 %v1510
  %v1547 = vpack.c.b16 %v1532, %v1531
  %v1548 = vpack.c.b16 %v1534, %v1533
  %v1549 = vpack.c.b16 %v1536, %v1535
  %v1550 = vpack.c.b16 %v1538, %v1537
  %v1551 = vpack.c.b16 %v1540, %v1539
  %v1552 = vpack.c.b16 %v1542, %v1541
  %v1553 = vpack.c.b16 %v1544, %v1543
  %v1554 = vpack.c.b16 %v1546, %v1545
  %1563 = vmatprep.subr.bf16.mxu0 0
  %1564 = vmatpush1.bf16.msra.mxu0 %v1547
  %1565 = vmatprep.subr.bf16.mxu0 0
  %1566 = vmatpush1.bf16.msra.mxu0 %v1548
  %1567 = vmatprep.subr.bf16.mxu0 0
  %1568 = vmatpush1.bf16.msra.mxu0 %v1549
  %1569 = vmatprep.subr.bf16.mxu0 0
  %1570 = vmatpush1.bf16.msra.mxu0 %v1550
  %1571 = vmatprep.subr.bf16.mxu0 0
  %1572 = vmatpush1.bf16.msra.mxu0 %v1551
  %1573 = vmatprep.subr.bf16.mxu0 0
  %1574 = vmatpush1.bf16.msra.mxu0 %v1552
  %1575 = vmatprep.subr.bf16.mxu0 0
  %1576 = vmatpush1.bf16.msra.mxu0 %v1553
  %1577 = vmatprep.subr.bf16.mxu0 0
  %1578 = vmatpush1.bf16.msra.mxu0 %v1554
  %1579 = vmatprep.subr.bf16.mxu0 0
  %1580 = vmatpush1.bf16.msra.mxu0 0
  %1581 = vmatprep.subr.bf16.mxu0 0
  %1582 = vmatpush1.bf16.msra.mxu0 0
  %1583 = vmatprep.subr.bf16.mxu0 0
  %1584 = vmatpush1.bf16.msra.mxu0 0
  %1585 = vmatprep.subr.bf16.mxu0 0
  %1586 = vmatpush1.bf16.msra.mxu0 0
  %1587 = vmatprep.subr.bf16.mxu0 0
  %1588 = vmatpush1.bf16.msra.mxu0 0
  %1589 = vmatprep.subr.bf16.mxu0 0
  %1590 = vmatpush1.bf16.msra.mxu0 0
  %1591 = vmatprep.subr.bf16.mxu0 0
  %1592 = vmatpush1.bf16.msra.mxu0 0
  %1593 = vmatprep.subr.bf16.mxu0 0
  %1594 = vmatpush1.bf16.msra.mxu0 0
  %1595 = vmatprep.mubr.bf16.mxu0 0
  %1596 = vmatmul.mubr.bf16.gmra.mrb[0].mxu0 %v1479
  %v1597 = vpop.f32.mrb[0].mxu0
  %v1598 = vadd.f32 %v1514, %v1597
  %v1599 = vpop.f32.mrb[0].mxu0
  %v1600 = vpop.f32.mrb[0].mxu0
  %v1601 = vadd.f32 %v1514, %v1600
  %v1602 = vpop.f32.mrb[0].mxu0
  %1603 = vmatprep.mubr.bf16.mxu0 0
  %1604 = vmatmul.mubr.bf16.gmra.mrb[0].mxu0 %v1480
  %v1605 = vpop.f32.mrb[0].mxu0
  %v1606 = vadd.f32 %v1514, %v1605
  %v1607 = vpop.f32.mrb[0].mxu0
  %v1608 = vpop.f32.mrb[0].mxu0
  %v1609 = vadd.f32 %v1514, %v1608
  %v1610 = vpop.f32.mrb[0].mxu0
  %1611 = vmatprep.mubr.bf16.mxu0 0
  %1612 = vmatmul.mubr.bf16.gmra.mrb[0].mxu0 %v1481
  %v1613 = vpop.f32.mrb[0].mxu0
  %v1614 = vadd.f32 %v1514, %v1613
  %v1615 = vpop.f32.mrb[0].mxu0
  %v1616 = vpop.f32.mrb[0].mxu0
  %v1617 = vadd.f32 %v1514, %v1616
  %v1618 = vpop.f32.mrb[0].mxu0
  %1619 = vmatprep.mubr.bf16.mxu0 0
  %1620 = vmatmul.mubr.bf16.gmra.mrb[0].mxu0 %v1482
  %v1621 = vpop.f32.mrb[0].mxu0
  %v1622 = vadd.f32 %v1514, %v1621
  %v1623 = vpop.f32.mrb[0].mxu0
  %v1624 = vpop.f32.mrb[0].mxu0
  %v1625 = vadd.f32 %v1514, %v1624
  %v1626 = vpop.f32.mrb[0].mxu0
  %1627 = vmatprep.mubr.bf16.mxu0 0
  %1628 = vmatmul.mubr.bf16.gmra.mrb[0].mxu0 %v1483
  %v1629 = vpop.f32.mrb[0].mxu0
  %v1630 = vadd.f32 %v1514, %v1629
  %v1631 = vpop.f32.mrb[0].mxu0
  %v1632 = vpop.f32.mrb[0].mxu0
  %v1633 = vadd.f32 %v1514, %v1632
  %v1634 = vpop.f32.mrb[0].mxu0
  %1635 = vmatprep.mubr.bf16.mxu0 0
  %1636 = vmatmul.mubr.bf16.gmra.mrb[0].mxu0 %v1484
  %v1637 = vpop.f32.mrb[0].mxu0
  %v1638 = vadd.f32 %v1514, %v1637
  %v1639 = vpop.f32.mrb[0].mxu0
  %v1640 = vpop.f32.mrb[0].mxu0
  %v1641 = vadd.f32 %v1514, %v1640
  %v1642 = vpop.f32.mrb[0].mxu0
  %1643 = vmatprep.mubr.bf16.mxu0 0
  %1644 = vmatmul.mubr.bf16.gmra.mrb[0].mxu0 %v1485
  %v1645 = vpop.f32.mrb[0].mxu0
  %v1646 = vadd.f32 %v1514, %v1645
  %v1647 = vpop.f32.mrb[0].mxu0
  %v1648 = vpop.f32.mrb[0].mxu0
  %v1649 = vadd.f32 %v1514, %v1648
  %v1650 = vpop.f32.mrb[0].mxu0
  %1651 = vmatprep.mubr.bf16.mxu0 0
  %1652 = vmatmul.mubr.bf16.gmra.mrb[0].mxu0 %v1486
  %v1653 = vpop.f32.mrb[0].mxu0
  %v1654 = vadd.f32 %v1514, %v1653
  %v1655 = vpop.f32.mrb[0].mxu0
  %v1656 = vpop.f32.mrb[0].mxu0
  %v1657 = vadd.f32 %v1514, %v1656
  %v1658 = vpop.f32.mrb[0].mxu0
  %1659 = vmatprep.mubr.bf16.mxu0 0
  %1660 = vmatmul.mubr.bf16.gmra.mrb[0].mxu0 %v1487
  %v1661 = vpop.f32.mrb[0].mxu0
  %v1662 = vadd.f32 %v1514, %v1661
  %v1663 = vpop.f32.mrb[0].mxu0
  %v1664 = vpop.f32.mrb[0].mxu0
  %v1665 = vadd.f32 %v1514, %v1664
  %v1666 = vpop.f32.mrb[0].mxu0
  %1667 = vmatprep.mubr.bf16.mxu0 0
  %1668 = vmatmul.mubr.bf16.gmra.mrb[0].mxu0 %v1488
  %v1669 = vpop.f32.mrb[0].mxu0
  %v1670 = vadd.f32 %v1514, %v1669
  %v1671 = vpop.f32.mrb[0].mxu0
  %v1672 = vpop.f32.mrb[0].mxu0
  %v1673 = vadd.f32 %v1514, %v1672
  %v1674 = vpop.f32.mrb[0].mxu0
  %1675 = vmatprep.mubr.bf16.mxu0 0
  %1676 = vmatmul.mubr.bf16.gmra.mrb[0].mxu0 %v1489
  %v1677 = vpop.f32.mrb[0].mxu0
  %v1678 = vadd.f32 %v1514, %v1677
  %v1679 = vpop.f32.mrb[0].mxu0
  %v1680 = vpop.f32.mrb[0].mxu0
  %v1681 = vadd.f32 %v1514, %v1680
  %v1682 = vpop.f32.mrb[0].mxu0
  %1683 = vmatprep.mubr.bf16.mxu0 0
  %1684 = vmatmul.mubr.bf16.gmra.mrb[0].mxu0 %v1490
  %v1685 = vpop.f32.mrb[0].mxu0
  %v1686 = vadd.f32 %v1514, %v1685
  %v1687 = vpop.f32.mrb[0].mxu0
  %v1688 = vpop.f32.mrb[0].mxu0
  %v1689 = vadd.f32 %v1514, %v1688
  %v1690 = vpop.f32.mrb[0].mxu0
  %1691 = vmatprep.mubr.bf16.mxu0 0
  %1692 = vmatmul.mubr.bf16.gmra.mrb[0].mxu0 %v1491
  %v1693 = vpop.f32.mrb[0].mxu0
  %v1694 = vadd.f32 %v1514, %v1693
  %v1695 = vpop.f32.mrb[0].mxu0
  %v1696 = vpop.f32.mrb[0].mxu0
  %v1697 = vadd.f32 %v1514, %v1696
  %v1698 = vpop.f32.mrb[0].mxu0
  %1699 = vmatprep.mubr.bf16.mxu0 0
  %1700 = vmatmul.mubr.bf16.gmra.mrb[0].mxu0 %v1492
  %v1701 = vpop.f32.mrb[0].mxu0
  %v1702 = vadd.f32 %v1514, %v1701
  %v1703 = vpop.f32.mrb[0].mxu0
  %v1704 = vpop.f32.mrb[0].mxu0
  %v1705 = vadd.f32 %v1514, %v1704
  %v1706 = vpop.f32.mrb[0].mxu0
  %1707 = vmatprep.mubr.bf16.mxu0 0
  %1708 = vmatmul.mubr.bf16.gmra.mrb[0].mxu0 %v1493
  %v1709 = vpop.f32.mrb[0].mxu0
  %v1710 = vadd.f32 %v1514, %v1709
  %v1711 = vpop.f32.mrb[0].mxu0
  %v1712 = vpop.f32.mrb[0].mxu0
  %v1713 = vadd.f32 %v1514, %v1712
  %v1714 = vpop.f32.mrb[0].mxu0
  %1715 = vmatprep.mubr.bf16.mxu0 0
  %1716 = vmatmul.mubr.bf16.gmra.mrb[0].mxu0 %v1494
  %v1717 = vpop.f32.mrb[0].mxu0
  %v1718 = vadd.f32 %v1514, %v1717
  %v1719 = vpop.f32.mrb[0].mxu0
  %v1720 = vpop.f32.mrb[0].mxu0
  %v1721 = vadd.f32 %v1514, %v1720
  %v1722 = vpop.f32.mrb[0].mxu0
  %1723 = vdwg.mxu0
  %v1724 = vmax.f32 %v1598, 0.0
  %v1725 = vmax.f32 %v1601, 0.0
  %v1726 = vmax.f32 %v1606, 0.0
  %v1727 = vmax.f32 %v1609, 0.0
  %v1728 = vmax.f32 %v1614, 0.0
  %v1729 = vmax.f32 %v1617, 0.0
  %v1730 = vmax.f32 %v1622, 0.0
  %v1731 = vmax.f32 %v1625, 0.0
  %v1732 = vmax.f32 %v1630, 0.0
  %v1733 = vmax.f32 %v1633, 0.0
  %v1734 = vmax.f32 %v1638, 0.0
  %v1735 = vmax.f32 %v1641, 0.0
  %v1736 = vmax.f32 %v1646, 0.0
  %v1737 = vmax.f32 %v1649, 0.0
  %v1738 = vmax.f32 %v1654, 0.0
  %v1739 = vmax.f32 %v1657, 0.0
  %v1740 = vmax.f32 %v1662, 0.0
  %v1741 = vmax.f32 %v1665, 0.0
  %v1742 = vmax.f32 %v1670, 0.0
  %v1743 = vmax.f32 %v1673, 0.0
  %v1744 = vmax.f32 %v1678, 0.0
  %v1745 = vmax.f32 %v1681, 0.0
  %v1746 = vmax.f32 %v1686, 0.0
  %v1747 = vmax.f32 %v1689, 0.0
  %v1748 = vmax.f32 %v1694, 0.0
  %v1749 = vmax.f32 %v1697, 0.0
  %v1750 = vmax.f32 %v1702, 0.0
  %v1751 = vmax.f32 %v1705, 0.0
  %v1752 = vmax.f32 %v1710, 0.0
  %v1753 = vmax.f32 %v1713, 0.0
  %v1754 = vmax.f32 %v1718, 0.0
  %v1755 = vmax.f32 %v1721, 0.0
  %v1756 = vpack.c.bf16 %v1725, %v1724
  %v1757 = vpack.c.bf16 %v1727, %v1726
  %v1758 = vpack.c.bf16 %v1729, %v1728
  %v1759 = vpack.c.bf16 %v1731, %v1730
  %v1760 = vpack.c.bf16 %v1733, %v1732
  %v1761 = vpack.c.bf16 %v1735, %v1734
  %v1762 = vpack.c.bf16 %v1737, %v1736
  %v1763 = vpack.c.bf16 %v1739, %v1738
  %v1764 = vpack.c.bf16 %v1741, %v1740
  %v1765 = vpack.c.bf16 %v1743, %v1742
  %v1766 = vpack.c.bf16 %v1745, %v1744
  %v1767 = vpack.c.bf16 %v1747, %v1746
  %v1768 = vpack.c.bf16 %v1749, %v1748
  %v1769 = vpack.c.bf16 %v1751, %v1750
  %v1770 = vpack.c.bf16 %v1753, %v1752
  %v1771 = vpack.c.bf16 %v1755, %v1754
  %v1772 = vld [vmem:[%s3] sm:$0xf]
  %v1773 = vld [vmem:[%s3 + $0x4] sm:$0xf]
  %v1774 = vld [vmem:[%s3 + $0x8] sm:$0xf]
  %v1775 = vld [vmem:[%s3 + $0xc] sm:$0xf]
  %v1776 = vld [vmem:[%s3 + $0x10] sm:$0xf]
  %v1777 = vld [vmem:[%s3 + $0x14] sm:$0xf]
  %v1778 = vld [vmem:[%s3 + $0x18] sm:$0xf]
  %v1779 = vld [vmem:[%s3 + $0x1c] sm:$0xf]
  %v1780 = vld [vmem:[%s3 + $0x20] sm:$0xf]
  %v1781 = vld [vmem:[%s3 + $0x24] sm:$0xf]
  %v1782 = vld [vmem:[%s3 + $0x28] sm:$0xf]
  %v1783 = vld [vmem:[%s3 + $0x2c] sm:$0xf]
  %v1784 = vld [vmem:[%s3 + $0x30] sm:$0xf]
  %v1785 = vld [vmem:[%s3 + $0x34] sm:$0xf]
  %v1786 = vld [vmem:[%s3 + $0x38] sm:$0xf]
  %v1787 = vld [vmem:[%s3 + $0x3c] sm:$0xf]
  %v1788 = vlaneseq
  %v1789 = vshrl.u32 %v1788, 7
  %v1790 = vsub.s32 2, %v1789
  %v1791 = vrot.slane %v357, %v1790
  %v1808 = vunpack.c.l.b16 %v1772
  %v1809 = vunpack.c.l.b16 %v1773
  %v1810 = vunpack.c.l.b16 %v1774
  %v1811 = vunpack.c.l.b16 %v1775
  %v1812 = vunpack.c.l.b16 %v1776
  %v1813 = vunpack.c.l.b16 %v1777
  %v1814 = vunpack.c.l.b16 %v1778
  %v1815 = vunpack.c.l.b16 %v1779
  %v1816 = vunpack.c.l.b16 %v1780
  %v1817 = vunpack.c.l.b16 %v1781
  %v1818 = vunpack.c.l.b16 %v1782
  %v1819 = vunpack.c.l.b16 %v1783
  %v1820 = vunpack.c.l.b16 %v1784
  %v1821 = vunpack.c.l.b16 %v1785
  %v1822 = vunpack.c.l.b16 %v1786
  %v1823 = vunpack.c.l.b16 %v1787
  %v1824 = vpack.c.b16 %v1809, %v1808
  %v1825 = vpack.c.b16 %v1811, %v1810
  %v1826 = vpack.c.b16 %v1813, %v1812
  %v1827 = vpack.c.b16 %v1815, %v1814
  %v1828 = vpack.c.b16 %v1817, %v1816
  %v1829 = vpack.c.b16 %v1819, %v1818
  %v1830 = vpack.c.b16 %v1821, %v1820
  %v1831 = vpack.c.b16 %v1823, %v1822
  %1840 = vmatprep.subr.bf16.mxu0 0
  %1841 = vmatpush1.bf16.msra.mxu0 %v1824
  %1842 = vmatprep.subr.bf16.mxu0 0
  %1843 = vmatpush1.bf16.msra.mxu0 %v1825
  %1844 = vmatprep.subr.bf16.mxu0 0
  %1845 = vmatpush1.bf16.msra.mxu0 %v1826
  %1846 = vmatprep.subr.bf16.mxu0 0
  %1847 = vmatpush1.bf16.msra.mxu0 %v1827
  %1848 = vmatprep.subr.bf16.mxu0 0
  %1849 = vmatpush1.bf16.msra.mxu0 %v1828
  %1850 = vmatprep.subr.bf16.mxu0 0
  %1851 = vmatpush1.bf16.msra.mxu0 %v1829
  %1852 = vmatprep.subr.bf16.mxu0 0
  %1853 = vmatpush1.bf16.msra.mxu0 %v1830
  %1854 = vmatprep.subr.bf16.mxu0 0
  %1855 = vmatpush1.bf16.msra.mxu0 %v1831
  %1856 = vmatprep.subr.bf16.mxu0 0
  %1857 = vmatpush1.bf16.msra.mxu0 0
  %1858 = vmatprep.subr.bf16.mxu0 0
  %1859 = vmatpush1.bf16.msra.mxu0 0
  %1860 = vmatprep.subr.bf16.mxu0 0
  %1861 = vmatpush1.bf16.msra.mxu0 0
  %1862 = vmatprep.subr.bf16.mxu0 0
  %1863 = vmatpush1.bf16.msra.mxu0 0
  %1864 = vmatprep.subr.bf16.mxu0 0
  %1865 = vmatpush1.bf16.msra.mxu0 0
  %1866 = vmatprep.subr.bf16.mxu0 0
  %1867 = vmatpush1.bf16.msra.mxu0 0
  %1868 = vmatprep.subr.bf16.mxu0 0
  %1869 = vmatpush1.bf16.msra.mxu0 0
  %1870 = vmatprep.subr.bf16.mxu0 0
  %1871 = vmatpush1.bf16.msra.mxu0 0
  %1872 = vmatprep.mubr.bf16.mxu0 0
  %1873 = vmatmul.mubr.bf16.gmra.mrb[0].mxu0 %v1756
  %v1874 = vpop.f32.mrb[0].mxu0
  %v1875 = vadd.f32 %v1791, %v1874
  %v1876 = vpop.f32.mrb[0].mxu0
  %v1877 = vpop.f32.mrb[0].mxu0
  %v1878 = vadd.f32 %v1791, %v1877
  %v1879 = vpop.f32.mrb[0].mxu0
  %1880 = vmatprep.mubr.bf16.mxu0 0
  %1881 = vmatmul.mubr.bf16.gmra.mrb[0].mxu0 %v1757
  %v1882 = vpop.f32.mrb[0].mxu0
  %v1883 = vadd.f32 %v1791, %v1882
  %v1884 = vpop.f32.mrb[0].mxu0
  %v1885 = vpop.f32.mrb[0].mxu0
  %v1886 = vadd.f32 %v1791, %v1885
  %v1887 = vpop.f32.mrb[0].mxu0
  %1888 = vmatprep.mubr.bf16.mxu0 0
  %1889 = vmatmul.mubr.bf16.gmra.mrb[0].mxu0 %v1758
  %v1890 = vpop.f32.mrb[0].mxu0
  %v1891 = vadd.f32 %v1791, %v1890
  %v1892 = vpop.f32.mrb[0].mxu0
  %v1893 = vpop.f32.mrb[0].mxu0
  %v1894 = vadd.f32 %v1791, %v1893
  %v1895 = vpop.f32.mrb[0].mxu0
  %1896 = vmatprep.mubr.bf16.mxu0 0
  %1897 = vmatmul.mubr.bf16.gmra.mrb[0].mxu0 %v1759
  %v1898 = vpop.f32.mrb[0].mxu0
  %v1899 = vadd.f32 %v1791, %v1898
  %v1900 = vpop.f32.mrb[0].mxu0
  %v1901 = vpop.f32.mrb[0].mxu0
  %v1902 = vadd.f32 %v1791, %v1901
  %v1903 = vpop.f32.mrb[0].mxu0
  %1904 = vmatprep.mubr.bf16.mxu0 0
  %1905 = vmatmul.mubr.bf16.gmra.mrb[0].mxu0 %v1760
  %v1906 = vpop.f32.mrb[0].mxu0
  %v1907 = vadd.f32 %v1791, %v1906
  %v1908 = vpop.f32.mrb[0].mxu0
  %v1909 = vpop.f32.mrb[0].mxu0
  %v1910 = vadd.f32 %v1791, %v1909
  %v1911 = vpop.f32.mrb[0].mxu0
  %1912 = vmatprep.mubr.bf16.mxu0 0
  %1913 = vmatmul.mubr.bf16.gmra.mrb[0].mxu0 %v1761
  %v1914 = vpop.f32.mrb[0].mxu0
  %v1915 = vadd.f32 %v1791, %v1914
  %v1916 = vpop.f32.mrb[0].mxu0
  %v1917 = vpop.f32.mrb[0].mxu0
  %v1918 = vadd.f32 %v1791, %v1917
  %v1919 = vpop.f32.mrb[0].mxu0
  %1920 = vmatprep.mubr.bf16.mxu0 0
  %1921 = vmatmul.mubr.bf16.gmra.mrb[0].mxu0 %v1762
  %v1922 = vpop.f32.mrb[0].mxu0
  %v1923 = vadd.f32 %v1791, %v1922
  %v1924 = vpop.f32.mrb[0].mxu0
  %v1925 = vpop.f32.mrb[0].mxu0
  %v1926 = vadd.f32 %v1791, %v1925
  %v1927 = vpop.f32.mrb[0].mxu0
  %1928 = vmatprep.mubr.bf16.mxu0 0
  %1929 = vmatmul.mubr.bf16.gmra.mrb[0].mxu0 %v1763
  %v1930 = vpop.f32.mrb[0].mxu0
  %v1931 = vadd.f32 %v1791, %v1930
  %v1932 = vpop.f32.mrb[0].mxu0
  %v1933 = vpop.f32.mrb[0].mxu0
  %v1934 = vadd.f32 %v1791, %v1933
  %v1935 = vpop.f32.mrb[0].mxu0
  %1936 = vmatprep.mubr.bf16.mxu0 0
  %1937 = vmatmul.mubr.bf16.gmra.mrb[0].mxu0 %v1764
  %v1938 = vpop.f32.mrb[0].mxu0
  %v1939 = vadd.f32 %v1791, %v1938
  %v1940 = vpop.f32.mrb[0].mxu0
  %v1941 = vpop.f32.mrb[0].mxu0
  %v1942 = vadd.f32 %v1791, %v1941
  %v1943 = vpop.f32.mrb[0].mxu0
  %1944 = vmatprep.mubr.bf16.mxu0 0
  %1945 = vmatmul.mubr.bf16.gmra.mrb[0].mxu0 %v1765
  %v1946 = vpop.f32.mrb[0].mxu0
  %v1947 = vadd.f32 %v1791, %v1946
  %v1948 = vpop.f32.mrb[0].mxu0
  %v1949 = vpop.f32.mrb[0].mxu0
  %v1950 = vadd.f32 %v1791, %v1949
  %v1951 = vpop.f32.mrb[0].mxu0
  %1952 = vmatprep.mubr.bf16.mxu0 0
  %1953 = vmatmul.mubr.bf16.gmra.mrb[0].mxu0 %v1766
  %v1954 = vpop.f32.mrb[0].mxu0
  %v1955 = vadd.f32 %v1791, %v1954
  %v1956 = vpop.f32.mrb[0].mxu0
  %v1957 = vpop.f32.mrb[0].mxu0
  %v1958 = vadd.f32 %v1791, %v1957
  %v1959 = vpop.f32.mrb[0].mxu0
  %1960 = vmatprep.mubr.bf16.mxu0 0
  %1961 = vmatmul.mubr.bf16.gmra.mrb[0].mxu0 %v1767
  %v1962 = vpop.f32.mrb[0].mxu0
  %v1963 = vadd.f32 %v1791, %v1962
  %v1964 = vpop.f32.mrb[0].mxu0
  %v1965 = vpop.f32.mrb[0].mxu0
  %v1966 = vadd.f32 %v1791, %v1965
  %v1967 = vpop.f32.mrb[0].mxu0
  %1968 = vmatprep.mubr.bf16.mxu0 0
  %1969 = vmatmul.mubr.bf16.gmra.mrb[0].mxu0 %v1768
  %v1970 = vpop.f32.mrb[0].mxu0
  %v1971 = vadd.f32 %v1791, %v1970
  %v1972 = vpop.f32.mrb[0].mxu0
  %v1973 = vpop.f32.mrb[0].mxu0
  %v1974 = vadd.f32 %v1791, %v1973
  %v1975 = vpop.f32.mrb[0].mxu0
  %1976 = vmatprep.mubr.bf16.mxu0 0
  %1977 = vmatmul.mubr.bf16.gmra.mrb[0].mxu0 %v1769
  %v1978 = vpop.f32.mrb[0].mxu0
  %v1979 = vadd.f32 %v1791, %v1978
  %v1980 = vpop.f32.mrb[0].mxu0
  %v1981 = vpop.f32.mrb[0].mxu0
  %v1982 = vadd.f32 %v1791, %v1981
  %v1983 = vpop.f32.mrb[0].mxu0
  %1984 = vmatprep.mubr.bf16.mxu0 0
  %1985 = vmatmul.mubr.bf16.gmra.mrb[0].mxu0 %v1770
  %v1986 = vpop.f32.mrb[0].mxu0
  %v1987 = vadd.f32 %v1791, %v1986
  %v1988 = vpop.f32.mrb[0].mxu0
  %v1989 = vpop.f32.mrb[0].mxu0
  %v1990 = vadd.f32 %v1791, %v1989
  %v1991 = vpop.f32.mrb[0].mxu0
  %1992 = vmatprep.mubr.bf16.mxu0 0
  %1993 = vmatmul.mubr.bf16.gmra.mrb[0].mxu0 %v1771
  %v1994 = vpop.f32.mrb[0].mxu0
  %v1995 = vadd.f32 %v1791, %v1994
  %v1996 = vpop.f32.mrb[0].mxu0
  %v1997 = vpop.f32.mrb[0].mxu0
  %v1998 = vadd.f32 %v1791, %v1997
  %v1999 = vpop.f32.mrb[0].mxu0
  %2000 = vdwg.mxu0
  %2001 = vst [vmem:[%s5] sm:$0xff] %v1875
  %2002 = vst [vmem:[%s5 + $0x8] sm:$0xff] %v1878
  %2003 = vst [vmem:[%s5 + $0x10] sm:$0xff] %v1883
  %2004 = vst [vmem:[%s5 + $0x18] sm:$0xff] %v1886
  %2005 = vst [vmem:[%s5 + $0x20] sm:$0xff] %v1891
  %2006 = vst [vmem:[%s5 + $0x28] sm:$0xff] %v1894
  %2007 = vst [vmem:[%s5 + $0x30] sm:$0xff] %v1899
  %2008 = vst [vmem:[%s5 + $0x38] sm:$0xff] %v1902
  %2009 = vst [vmem:[%s5 + $0x40] sm:$0xff] %v1907
  %2010 = vst [vmem:[%s5 + $0x48] sm:$0xff] %v1910
  %2011 = vst [vmem:[%s5 + $0x50] sm:$0xff] %v1915
  %2012 = vst [vmem:[%s5 + $0x58] sm:$0xff] %v1918
  %2013 = vst [vmem:[%s5 + $0x60] sm:$0xff] %v1923
  %2014 = vst [vmem:[%s5 + $0x68] sm:$0xff] %v1926
  %2015 = vst [vmem:[%s5 + $0x70] sm:$0xff] %v1931
  %2016 = vst [vmem:[%s5 + $0x78] sm:$0xff] %v1934
  %2017 = vst [vmem:[%s5 + $0x80] sm:$0xff] %v1939
  %2018 = vst [vmem:[%s5 + $0x88] sm:$0xff] %v1942
  %2019 = vst [vmem:[%s5 + $0x90] sm:$0xff] %v1947
  %2020 = vst [vmem:[%s5 + $0x98] sm:$0xff] %v1950
  %2021 = vst [vmem:[%s5 + $0xa0] sm:$0xff] %v1955
  %2022 = vst [vmem:[%s5 + $0xa8] sm:$0xff] %v1958
  %2023 = vst [vmem:[%s5 + $0xb0] sm:$0xff] %v1963
  %2024 = vst [vmem:[%s5 + $0xb8] sm:$0xff] %v1966
  %2025 = vst [vmem:[%s5 + $0xc0] sm:$0xff] %v1971
  %2026 = vst [vmem:[%s5 + $0xc8] sm:$0xff] %v1974
  %2027 = vst [vmem:[%s5 + $0xd0] sm:$0xff] %v1979
  %2028 = vst [vmem:[%s5 + $0xd8] sm:$0xff] %v1982
  %2029 = vst [vmem:[%s5 + $0xe0] sm:$0xff] %v1987
  %2030 = vst [vmem:[%s5 + $0xe8] sm:$0xff] %v1990
  %2031 = vst [vmem:[%s5 + $0xf0] sm:$0xff] %v1995
  %2032 = vst [vmem:[%s5 + $0xf8] sm:$0xff] %v1998
  // Predicated region
  $region22: #{mlp_forward.1} parent=0 // pred_check
    _
  $region23: #{mlp_forward.1} parent=0 // pred_check_branch
    %2034 = sbr.rel (0) target = $region25
  $region24: #{mlp_forward.1} parent=0 // pred_region
    _
  $region25: #{mlp_forward.1} parent=0 // pred_fallthru
    _
  // Predicated region
  $region26: #{mlp_forward.1} parent=0 // pred_check
    _
  $region27: #{mlp_forward.1} parent=0 // pred_check_branch
    %2036 = sbr.rel (0) target = $region29
  $region28: #{mlp_forward.1} parent=0 // pred_region
    _
  $region29: #{mlp_forward.1} parent=0 // pred_fallthru
    _

</llo_original>
